<compile_context>
chip_gen: v7x
topology: tpu7x:2x2x1
jax: 0.10.0
libtpu: 0.0.40
codegen_flags: <defaults>
</compile_context>

<pallas_src>
import functools

import numpy as np

import jax
import jax.numpy as jnp
from jax.experimental import pallas as pl
from jax.experimental.pallas import tpu as pltpu


def _round_up(x, m):
    return (x + m - 1) // m * m


def _nbytes(shape, dtype):
    n = 1
    for s in shape:
        n *= int(s)
    return n * jnp.dtype(dtype).itemsize


def lstm_decoder_kernel(x_ref, w_ih_ref, w_hh_ref, b_ref, w_out_ref, b_out_ref,
                        out_ref, gates_scr, hall_scr, h_scr, c_scr, *, unroll):
    """One (sentence_block, time_chunk) grid step.

    x_ref     : [TC*SB, D]    time-major tokens of this chunk (row = t*SB + b)
    w_ih_ref  : [D, 4*Hp]     input weights, gate-padded to Hp lanes per gate
    w_hh_ref  : [Hp, 4*Hp]    recurrent weights (f32), padded rows/cols are 0
    b_ref     : [1, 4*Hp]     b_ih + b_hh, gate-padded
    w_out_ref : [Hp, Op]      output projection, padded rows/cols are 0
    b_out_ref : [1, Op]
    out_ref   : [TC*SB, Op]   logits (lane-padded)
    Scratch: gates [TC*SB,4Hp] f32, hall [TC*SB,Hp], h/c [SB,Hp] f32 (carried
    across time chunks; re-initialized at time-chunk 0).
    """
    SB, Hp = h_scr.shape
    rows = gates_scr.shape[0]
    TC = rows // SB

    # Fresh (h, c) at the start of every sentence block (time-chunk index 0).
    @pl.when(pl.program_id(1) == 0)
    def _():
        h_scr[...] = jnp.zeros_like(h_scr)
        c_scr[...] = jnp.zeros_like(c_scr)

    # (1) Bulk input projection for the whole chunk -> MXU.
    gates_scr[...] = (
        jnp.dot(x_ref[...], w_ih_ref[...], preferred_element_type=jnp.float32)
        + b_ref[...]
    )

    # (2) Batched LSTM recurrence over the chunk's timesteps.
    @pl.loop(0, TC // unroll)
    def _(tb):
        h = h_scr[...]
        c = c_scr[...]
        for u in range(unroll):
            row = pl.multiple_of(tb * (unroll * SB) + u * SB, SB)
            g = gates_scr[pl.ds(row, SB), :] + jnp.dot(
                h, w_hh_ref[...], preferred_element_type=jnp.float32)
            i_g = jax.nn.sigmoid(g[:, 0 * Hp:1 * Hp])
            f_g = jax.nn.sigmoid(g[:, 1 * Hp:2 * Hp])
            g_g = jnp.tanh(g[:, 2 * Hp:3 * Hp])
            o_g = jax.nn.sigmoid(g[:, 3 * Hp:4 * Hp])
            c = f_g * c + i_g * g_g
            h = o_g * jnp.tanh(c)
            hall_scr[pl.ds(row, SB), :] = h.astype(hall_scr.dtype)
        h_scr[...] = h
        c_scr[...] = c

    # (3) Bulk output projection for the whole chunk -> MXU, lane-dense store.
    out_ref[...] = (
        jnp.dot(hall_scr[...], w_out_ref[...], preferred_element_type=jnp.float32)
        + b_out_ref[...]
    ).astype(out_ref.dtype)


def lstm_decoder_forward(encoded_hiddens, seq_lens, params, *,
                         gemm_dtype=jnp.float32, sentence_block=None,
                         time_chunk=None, unroll=4):
    """Pads/reshapes, launches the Pallas kernel, and un-pads the result.

    encoded_hiddens: [T, D] (all sentences concatenated, like the torch module)
    seq_lens: concrete Python list of sentence lengths (sum == T)
    gemm_dtype: operand dtype for the two bulk GEMMs (bf16 fast path on v6e/v7x);
                the recurrence math is always f32.
    """
    seq_lens = [int(l) for l in seq_lens]
    T, D = encoded_hiddens.shape
    H = params["w_hh"].shape[0]
    O = params["w_out"].shape[1]
    B = len(seq_lens)
    Tmax = max(seq_lens)

    f32 = jnp.float32
    Hp = _round_up(H, 128)          # lane-pad hidden dim (one full vreg per gate)
    Op = _round_up(O, 128)          # lane-pad output dim (unmasked vst)

    # Sentence-batch geometry.
    unroll = max(1, int(unroll))
    SB = _round_up(sentence_block if sentence_block is not None else min(B, 64), 8)
    S_blocks = -(-B // SB)
    if time_chunk is None:
        time_chunk = max(unroll, (2048 // SB) // unroll * unroll)
    TC = _round_up(min(int(time_chunk), _round_up(Tmax, unroll)), unroll)
    Tmax_pad = _round_up(Tmax, TC)
    num_tc = Tmax_pad // TC
    rows_per_chunk = TC * SB
    total_rows = S_blocks * Tmax_pad * SB

    # Gather/scatter index maps (seq_lens is concrete -> plain numpy).
    tok_idx = np.zeros((total_rows,), np.int32)   # padded row -> source token (pad -> 0)
    out_row = np.zeros((T,), np.int32)            # source token -> padded row
    pos = 0
    for gb, L in enumerate(seq_lens):
        s, b = divmod(gb, SB)
        for t in range(L):
            r = (s * Tmax_pad + t) * SB + b
            tok_idx[r] = pos + t
            out_row[pos + t] = r
        pos += L

    x_flat = jnp.take(encoded_hiddens.astype(f32), jnp.asarray(tok_idx),
                      axis=0).astype(gemm_dtype)                    # [total_rows, D]

    # Lane-pad the weights; padded gate columns / hidden rows are zero so the
    # padded h/c lanes stay exactly 0 throughout the recurrence.
    w_ih = params["w_ih"].astype(f32)
    w_hh = params["w_hh"].astype(f32)
    b = params["b"].astype(f32).reshape(1, 4 * H)
    w_out = params["w_out"].astype(f32)
    b_out = params["b_out"].astype(f32).reshape(1, O)

    w_ih_p = jnp.zeros((D, 4 * Hp), f32)
    w_hh_p = jnp.zeros((Hp, 4 * Hp), f32)
    b_p = jnp.zeros((1, 4 * Hp), f32)
    for k in range(4):
        w_ih_p = w_ih_p.at[:, k * Hp:k * Hp + H].set(w_ih[:, k * H:(k + 1) * H])
        w_hh_p = w_hh_p.at[:H, k * Hp:k * Hp + H].set(w_hh[:, k * H:(k + 1) * H])
        b_p = b_p.at[:, k * Hp:k * Hp + H].set(b[:, k * H:(k + 1) * H])
    w_out_p = jnp.zeros((Hp, Op), f32).at[:H, :O].set(w_out)
    b_out_p = jnp.zeros((1, Op), f32).at[:, :O].set(b_out)

    w_ih_p = w_ih_p.astype(gemm_dtype)
    w_out_p = w_out_p.astype(gemm_dtype)

    # Explicit VMEM budget (v5e default scoped limit is only 16 MiB; v7x has
    # 64 MiB physical) — size for double-buffered x/out blocks + residents.
    est = (2 * _nbytes((rows_per_chunk, D), gemm_dtype)
           + 2 * _nbytes((rows_per_chunk, Op), f32)
           + 2 * (_nbytes((D, 4 * Hp), gemm_dtype) + _nbytes((Hp, 4 * Hp), f32)
                  + _nbytes((1, 4 * Hp), f32) + _nbytes((Hp, Op), gemm_dtype)
                  + _nbytes((1, Op), f32))
           + _nbytes((rows_per_chunk, 4 * Hp), f32)
           + _nbytes((rows_per_chunk, Hp), gemm_dtype)
           + 2 * _nbytes((SB, Hp), f32))
    vmem_limit = int(min(max(2 * est, 32 << 20), 48 << 20))

    kernel = functools.partial(lstm_decoder_kernel, unroll=unroll)

    out_flat = pl.pallas_call(
        kernel,
        out_shape=jax.ShapeDtypeStruct((total_rows, Op), f32),
        grid=(S_blocks, num_tc),
        in_specs=[
            pl.BlockSpec((rows_per_chunk, D), lambda s, c: (s * num_tc + c, 0)),
            pl.BlockSpec((D, 4 * Hp), lambda s, c: (0, 0)),
            pl.BlockSpec((Hp, 4 * Hp), lambda s, c: (0, 0)),
            pl.BlockSpec((1, 4 * Hp), lambda s, c: (0, 0)),
            pl.BlockSpec((Hp, Op), lambda s, c: (0, 0)),
            pl.BlockSpec((1, Op), lambda s, c: (0, 0)),
        ],
        out_specs=pl.BlockSpec((rows_per_chunk, Op),
                               lambda s, c: (s * num_tc + c, 0)),
        scratch_shapes=[
            pltpu.VMEM((rows_per_chunk, 4 * Hp), f32),   # gates (input proj + rec)
            pltpu.VMEM((rows_per_chunk, Hp), gemm_dtype),  # h history for this chunk
            pltpu.VMEM((SB, Hp), f32),                   # h carry
            pltpu.VMEM((SB, Hp), f32),                   # c carry
        ],
        compiler_params=pltpu.CompilerParams(
            dimension_semantics=("parallel", "arbitrary"),
            vmem_limit_bytes=vmem_limit,
        ),
    )(x_flat, w_ih_p, w_hh_p, b_p, w_out_p, b_out_p)

    # Un-pad: pick each real token's row and drop padded output lanes.
    return jnp.take(out_flat, jnp.asarray(out_row), axis=0)[:, :O]


def reference_forward(encoded_hiddens, seq_lens, params):
    """Pure-JAX reference identical to the PyTorch per-sentence LSTM loop."""
    H = params["w_hh"].shape[0]
    T = encoded_hiddens.shape[0]
    starts = [0]
    for l in seq_lens[:-1]:
        starts.append(starts[-1] + l)
    reset = jnp.zeros((T,), jnp.float32).at[jnp.array(starts)].set(1.0)

    gates_x = encoded_hiddens @ params["w_ih"] + params["b"][0]

    def step(carry, inp):
        h, c = carry
        gx, r = inp
        keep = 1.0 - r
        h, c = h * keep, c * keep
        g = gx + h @ params["w_hh"]
        i_g = jax.nn.sigmoid(g[0 * H:1 * H])
        f_g = jax.nn.sigmoid(g[1 * H:2 * H])
        g_g = jnp.tanh(g[2 * H:3 * H])
        o_g = jax.nn.sigmoid(g[3 * H:4 * H])
        c = f_g * c + i_g * g_g
        h = o_g * jnp.tanh(c)
        return (h, c), h

    (_, _), hs = jax.lax.scan(
        step, (jnp.zeros((H,), jnp.float32), jnp.zeros((H,), jnp.float32)),
        (gates_x, reset))
    return hs @ params["w_out"] + params["b_out"][0]


def make_params(key, input_dim, hidden_dim, output_dim):
    """Deterministic synthetic parameters (shapes match nn.LSTM / nn.Linear)."""
    k = jax.random.split(key, 6)
    s = 1.0 / jnp.sqrt(hidden_dim)
    return {
        # torch weight_ih_l0 is [4H, D]; we store its transpose [D, 4H].
        "w_ih": jax.random.uniform(k[0], (input_dim, 4 * hidden_dim), jnp.float32, -s, s),
        # torch weight_hh_l0 is [4H, H]; transpose -> [H, 4H].
        "w_hh": jax.random.uniform(k[1], (hidden_dim, 4 * hidden_dim), jnp.float32, -s, s),
        # b_ih + b_hh folded together.
        "b": jax.random.uniform(k[2], (1, 4 * hidden_dim), jnp.float32, -s, s),
        # nn.Linear(hidden_dim, output_dim): weight [O, H] -> transpose [H, O].
        "w_out": jax.random.uniform(k[3], (hidden_dim, output_dim), jnp.float32, -s, s),
        "b_out": jax.random.uniform(k[4], (1, output_dim), jnp.float32, -s, s),
    }


if __name__ == "__main__":
    input_dim, hidden_dim, output_dim = 32, 32, 16
    seq_lens = [5, 3, 7]                 # three sentences, T = 15 tokens total
    T = sum(seq_lens)

    key = jax.random.PRNGKey(0)
    k_x, k_p = jax.random.split(key)
    encoded_hiddens = jax.random.normal(k_x, (T, input_dim), jnp.float32)
    params = make_params(k_p, input_dim, hidden_dim, output_dim)

    ref = jax.block_until_ready(reference_forward(encoded_hiddens, seq_lens, params))

    # f32 path (exercises 2 time chunks + unroll-by-2 + carry across chunks).
    out = lstm_decoder_forward(encoded_hiddens, seq_lens, params,
                               time_chunk=4, unroll=2)
    out = jax.block_until_ready(out)
    assert out.shape == (T, output_dim)
    assert jnp.allclose(out, ref, atol=1e-4, rtol=1e-4), "f32 mismatch vs JAX reference"

    # bf16 bulk-GEMM operands (v6e/v7x fast path); recurrence stays f32.
    out_bf16 = lstm_decoder_forward(encoded_hiddens, seq_lens, params,
                                    gemm_dtype=jnp.bfloat16, time_chunk=4, unroll=2)
    out_bf16 = jax.block_until_ready(out_bf16)
    assert jnp.allclose(out_bf16, ref, atol=5e-2, rtol=5e-2), "bf16 mismatch vs JAX reference"

    print("KERNEL_OK")
</pallas_src>

<mosaic_0001>
module attributes {stable_mosaic.version = 11 : i64} {
  func.func @lstm_decoder_kernel(%arg0: i32, %arg1: i32, %arg2: memref<32x32xf32, #tpu.memory_space<vmem>>, %arg3: memref<32x512xf32, #tpu.memory_space<vmem>>, %arg4: memref<128x512xf32, #tpu.memory_space<vmem>>, %arg5: memref<1x512xf32, #tpu.memory_space<vmem>>, %arg6: memref<128x128xf32, #tpu.memory_space<vmem>>, %arg7: memref<1x128xf32, #tpu.memory_space<vmem>>, %arg8: memref<32x128xf32, #tpu.memory_space<vmem>>, %arg9: memref<32x512xf32, #tpu.memory_space<vmem>>, %arg10: memref<32x128xf32, #tpu.memory_space<vmem>>, %arg11: memref<8x128xf32, #tpu.memory_space<vmem>>, %arg12: memref<8x128xf32, #tpu.memory_space<vmem>>) attributes {dimension_semantics = [#tpu.dimension_semantics<parallel>, #tpu.dimension_semantics<arbitrary>], iteration_bounds = array<i64: 1, 2>, scalar_prefetch = 0 : i64, scratch_operands = 4 : i64, tpu.core_type = #tpu.core_type<tc>, window_params = [{transform_indices = @transform_0, window_bounds = array<i64: 32, 32>}, {pipeline_mode = #tpu.pipeline_mode<synchronous>, transform_indices = @transform_1, window_bounds = array<i64: 32, 512>}, {pipeline_mode = #tpu.pipeline_mode<synchronous>, transform_indices = @transform_2, window_bounds = array<i64: 128, 512>}, {pipeline_mode = #tpu.pipeline_mode<synchronous>, transform_indices = @transform_3, window_bounds = array<i64: 1, 512>}, {pipeline_mode = #tpu.pipeline_mode<synchronous>, transform_indices = @transform_4, window_bounds = array<i64: 128, 128>}, {pipeline_mode = #tpu.pipeline_mode<synchronous>, transform_indices = @transform_5, window_bounds = array<i64: 1, 128>}, {transform_indices = @transform_6, window_bounds = array<i64: 32, 128>}]} {
    %c0_i32 = arith.constant 0 : i32
    %0 = arith.cmpi eq, %arg1, %c0_i32 : i32
    %1 = arith.extui %0 : i1 to i32
    %c0_i32_0 = arith.constant 0 : i32
    %2 = arith.cmpi ne, %1, %c0_i32_0 : i32
    scf.if %2 {
      %cst_19 = arith.constant 0.000000e+00 : f32
      %18 = vector.broadcast %cst_19 : f32 to vector<8x128xf32>
      %c0_20 = arith.constant 0 : index
      %c0_21 = arith.constant 0 : index
      %19 = vector.load %arg11[%c0_20, %c0_21] : memref<8x128xf32, #tpu.memory_space<vmem>>, vector<8x128xf32>
      tpu.vector_store %arg11[%c0_20, %c0_21], %18 {strides = array<i32>} : memref<8x128xf32, #tpu.memory_space<vmem>>, vector<8x128xf32>,
      %cst_22 = arith.constant 0.000000e+00 : f32
      %20 = vector.broadcast %cst_22 : f32 to vector<8x128xf32>
      %c0_23 = arith.constant 0 : index
      %c0_24 = arith.constant 0 : index
      %21 = vector.load %arg12[%c0_23, %c0_24] : memref<8x128xf32, #tpu.memory_space<vmem>>, vector<8x128xf32>
      tpu.vector_store %arg12[%c0_23, %c0_24], %20 {strides = array<i32>} : memref<8x128xf32, #tpu.memory_space<vmem>>, vector<8x128xf32>,
    } else {
    }
    %c0 = arith.constant 0 : index
    %c0_1 = arith.constant 0 : index
    %3 = vector.load %arg2[%c0, %c0_1] : memref<32x32xf32, #tpu.memory_space<vmem>>, vector<32x32xf32>
    %c0_2 = arith.constant 0 : index
    %c0_3 = arith.constant 0 : index
    %4 = vector.load %arg3[%c0_2, %c0_3] : memref<32x512xf32, #tpu.memory_space<vmem>>, vector<32x512xf32>
    %cst = arith.constant dense<0.000000e+00> : vector<32x512xf32>
    %5 = tpu.matmul %3, %4, %cst {dimension_numbers = #tpu.dot_dimension_numbers<[1], [0], [0], [1], [0, 0, 1, 1], [], []>} : vector<32x32xf32>, vector<32x512xf32>, vector<32x512xf32> -> vector<32x512xf32>
    %c0_4 = arith.constant 0 : index
    %c0_5 = arith.constant 0 : index
    %6 = vector.load %arg5[%c0_4, %c0_5] : memref<1x512xf32, #tpu.memory_space<vmem>>, vector<1x512xf32>
    %7 = vector.broadcast %6 : vector<1x512xf32> to vector<32x512xf32>
    %8 = arith.addf %5, %7 : vector<32x512xf32>
    %c0_6 = arith.constant 0 : index
    %c0_7 = arith.constant 0 : index
    %9 = vector.load %arg9[%c0_6, %c0_7] : memref<32x512xf32, #tpu.memory_space<vmem>>, vector<32x512xf32>
    tpu.vector_store %arg9[%c0_6, %c0_7], %8 {strides = array<i32>} : memref<32x512xf32, #tpu.memory_space<vmem>>, vector<32x512xf32>,
    %c0_i32_8 = arith.constant 0 : i32
    %c2_i32 = arith.constant 2 : i32
    %10 = arith.addi %c0_i32_8, %c2_i32 : i32
    %c1_i32 = arith.constant 1 : i32
    scf.for %arg13 = %c0_i32_8 to %10 step %c1_i32  : i32 {
      %c1_i32_19 = arith.constant 1 : i32
      %18 = arith.muli %arg13, %c1_i32_19 : i32
      %c0_i32_20 = arith.constant 0 : i32
      %19 = arith.addi %c0_i32_20, %18 : i32
      %c0_21 = arith.constant 0 : index
      %c0_22 = arith.constant 0 : index
      %20 = vector.load %arg11[%c0_21, %c0_22] : memref<8x128xf32, #tpu.memory_space<vmem>>, vector<8x128xf32>
      %c0_23 = arith.constant 0 : index
      %c0_24 = arith.constant 0 : index
      %21 = vector.load %arg12[%c0_23, %c0_24] : memref<8x128xf32, #tpu.memory_space<vmem>>, vector<8x128xf32>
      %c16_i32 = arith.constant 16 : i32
      %22 = arith.muli %19, %c16_i32 : i32
      %c0_i32_25 = arith.constant 0 : i32
      %23 = arith.addi %22, %c0_i32_25 : i32
      %24 = tpu.assume_multiple %23, 8 : i32
      %25 = arith.index_cast %24 : i32 to index
      %c0_26 = arith.constant 0 : index
      %26 = vector.load %arg9[%25, %c0_26] : memref<32x512xf32, #tpu.memory_space<vmem>>, vector<8x512xf32>
      %c0_27 = arith.constant 0 : index
      %c0_28 = arith.constant 0 : index
      %27 = vector.load %arg4[%c0_27, %c0_28] : memref<128x512xf32, #tpu.memory_space<vmem>>, vector<128x512xf32>
      %cst_29 = arith.constant dense<0.000000e+00> : vector<8x512xf32>
      %28 = tpu.matmul %20, %27, %cst_29 {dimension_numbers = #tpu.dot_dimension_numbers<[1], [0], [0], [1], [0, 0, 1, 1], [], []>} : vector<8x128xf32>, vector<128x512xf32>, vector<8x512xf32> -> vector<8x512xf32>
      %29 = arith.addf %26, %28 : vector<8x512xf32>
      %30 = vector.extract_strided_slice %29 {offsets = [0, 0], sizes = [8, 128], strides = [1, 1]} : vector<8x512xf32> to vector<8x128xf32>
      %31 = arith.negf %30 : vector<8x128xf32>
      %32 = math.exp %31 : vector<8x128xf32>
      %cst_30 = arith.constant 1.000000e+00 : f32
      %33 = vector.broadcast %cst_30 : f32 to vector<8x128xf32>
      %34 = arith.addf %33, %32 : vector<8x128xf32>
      %35 = arith.divf %33, %34 : vector<8x128xf32>
      %36 = vector.extract_strided_slice %29 {offsets = [0, 128], sizes = [8, 128], strides = [1, 1]} : vector<8x512xf32> to vector<8x128xf32>
      %37 = arith.negf %36 : vector<8x128xf32>
      %38 = math.exp %37 : vector<8x128xf32>
      %cst_31 = arith.constant 1.000000e+00 : f32
      %39 = vector.broadcast %cst_31 : f32 to vector<8x128xf32>
      %40 = arith.addf %39, %38 : vector<8x128xf32>
      %41 = arith.divf %39, %40 : vector<8x128xf32>
      %42 = vector.extract_strided_slice %29 {offsets = [0, 256], sizes = [8, 128], strides = [1, 1]} : vector<8x512xf32> to vector<8x128xf32>
      %43 = math.tanh %42 : vector<8x128xf32>
      %44 = vector.extract_strided_slice %29 {offsets = [0, 384], sizes = [8, 128], strides = [1, 1]} : vector<8x512xf32> to vector<8x128xf32>
      %45 = arith.negf %44 : vector<8x128xf32>
      %46 = math.exp %45 : vector<8x128xf32>
      %cst_32 = arith.constant 1.000000e+00 : f32
      %47 = vector.broadcast %cst_32 : f32 to vector<8x128xf32>
      %48 = arith.addf %47, %46 : vector<8x128xf32>
      %49 = arith.divf %47, %48 : vector<8x128xf32>
      %50 = arith.mulf %41, %21 : vector<8x128xf32>
      %51 = arith.mulf %35, %43 : vector<8x128xf32>
      %52 = arith.addf %50, %51 : vector<8x128xf32>
      %53 = math.tanh %52 : vector<8x128xf32>
      %54 = arith.mulf %49, %53 : vector<8x128xf32>
      %55 = arith.index_cast %24 : i32 to index
      %c0_33 = arith.constant 0 : index
      %56 = vector.load %arg10[%55, %c0_33] : memref<32x128xf32, #tpu.memory_space<vmem>>, vector<8x128xf32>
      tpu.vector_store %arg10[%55, %c0_33], %54 {strides = array<i32>} : memref<32x128xf32, #tpu.memory_space<vmem>>, vector<8x128xf32>,
      %c16_i32_34 = arith.constant 16 : i32
      %57 = arith.muli %19, %c16_i32_34 : i32
      %c8_i32 = arith.constant 8 : i32
      %58 = arith.addi %57, %c8_i32 : i32
      %59 = tpu.assume_multiple %58, 8 : i32
      %60 = arith.index_cast %59 : i32 to index
      %c0_35 = arith.constant 0 : index
      %61 = vector.load %arg9[%60, %c0_35] : memref<32x512xf32, #tpu.memory_space<vmem>>, vector<8x512xf32>
      %c0_36 = arith.constant 0 : index
      %c0_37 = arith.constant 0 : index
      %62 = vector.load %arg4[%c0_36, %c0_37] : memref<128x512xf32, #tpu.memory_space<vmem>>, vector<128x512xf32>
      %cst_38 = arith.constant dense<0.000000e+00> : vector<8x512xf32>
      %63 = tpu.matmul %54, %62, %cst_38 {dimension_numbers = #tpu.dot_dimension_numbers<[1], [0], [0], [1], [0, 0, 1, 1], [], []>} : vector<8x128xf32>, vector<128x512xf32>, vector<8x512xf32> -> vector<8x512xf32>
      %64 = arith.addf %61, %63 : vector<8x512xf32>
      %65 = vector.extract_strided_slice %64 {offsets = [0, 0], sizes = [8, 128], strides = [1, 1]} : vector<8x512xf32> to vector<8x128xf32>
      %66 = arith.negf %65 : vector<8x128xf32>
      %67 = math.exp %66 : vector<8x128xf32>
      %cst_39 = arith.constant 1.000000e+00 : f32
      %68 = vector.broadcast %cst_39 : f32 to vector<8x128xf32>
      %69 = arith.addf %68, %67 : vector<8x128xf32>
      %70 = arith.divf %68, %69 : vector<8x128xf32>
      %71 = vector.extract_strided_slice %64 {offsets = [0, 128], sizes = [8, 128], strides = [1, 1]} : vector<8x512xf32> to vector<8x128xf32>
      %72 = arith.negf %71 : vector<8x128xf32>
      %73 = math.exp %72 : vector<8x128xf32>
      %cst_40 = arith.constant 1.000000e+00 : f32
      %74 = vector.broadcast %cst_40 : f32 to vector<8x128xf32>
      %75 = arith.addf %74, %73 : vector<8x128xf32>
      %76 = arith.divf %74, %75 : vector<8x128xf32>
      %77 = vector.extract_strided_slice %64 {offsets = [0, 256], sizes = [8, 128], strides = [1, 1]} : vector<8x512xf32> to vector<8x128xf32>
      %78 = math.tanh %77 : vector<8x128xf32>
      %79 = vector.extract_strided_slice %64 {offsets = [0, 384], sizes = [8, 128], strides = [1, 1]} : vector<8x512xf32> to vector<8x128xf32>
      %80 = arith.negf %79 : vector<8x128xf32>
      %81 = math.exp %80 : vector<8x128xf32>
      %cst_41 = arith.constant 1.000000e+00 : f32
      %82 = vector.broadcast %cst_41 : f32 to vector<8x128xf32>
      %83 = arith.addf %82, %81 : vector<8x128xf32>
      %84 = arith.divf %82, %83 : vector<8x128xf32>
      %85 = arith.mulf %76, %52 : vector<8x128xf32>
      %86 = arith.mulf %70, %78 : vector<8x128xf32>
      %87 = arith.addf %85, %86 : vector<8x128xf32>
      %88 = math.tanh %87 : vector<8x128xf32>
      %89 = arith.mulf %84, %88 : vector<8x128xf32>
      %90 = arith.index_cast %59 : i32 to index
      %c0_42 = arith.constant 0 : index
      %91 = vector.load %arg10[%90, %c0_42] : memref<32x128xf32, #tpu.memory_space<vmem>>, vector<8x128xf32>
      tpu.vector_store %arg10[%90, %c0_42], %89 {strides = array<i32>} : memref<32x128xf32, #tpu.memory_space<vmem>>, vector<8x128xf32>,
      %c0_43 = arith.constant 0 : index
      %c0_44 = arith.constant 0 : index
      %92 = vector.load %arg11[%c0_43, %c0_44] : memref<8x128xf32, #tpu.memory_space<vmem>>, vector<8x128xf32>
      tpu.vector_store %arg11[%c0_43, %c0_44], %89 {strides = array<i32>} : memref<8x128xf32, #tpu.memory_space<vmem>>, vector<8x128xf32>,
      %c0_45 = arith.constant 0 : index
      %c0_46 = arith.constant 0 : index
      %93 = vector.load %arg12[%c0_45, %c0_46] : memref<8x128xf32, #tpu.memory_space<vmem>>, vector<8x128xf32>
      tpu.vector_store %arg12[%c0_45, %c0_46], %87 {strides = array<i32>} : memref<8x128xf32, #tpu.memory_space<vmem>>, vector<8x128xf32>,
    }
    %c2_i32_9 = arith.constant 2 : i32
    %c0_10 = arith.constant 0 : index
    %c0_11 = arith.constant 0 : index
    %11 = vector.load %arg10[%c0_10, %c0_11] : memref<32x128xf32, #tpu.memory_space<vmem>>, vector<32x128xf32>
    %c0_12 = arith.constant 0 : index
    %c0_13 = arith.constant 0 : index
    %12 = vector.load %arg6[%c0_12, %c0_13] : memref<128x128xf32, #tpu.memory_space<vmem>>, vector<128x128xf32>
    %cst_14 = arith.constant dense<0.000000e+00> : vector<32x128xf32>
    %13 = tpu.matmul %11, %12, %cst_14 {dimension_numbers = #tpu.dot_dimension_numbers<[1], [0], [0], [1], [0, 0, 1, 1], [], []>} : vector<32x128xf32>, vector<128x128xf32>, vector<32x128xf32> -> vector<32x128xf32>
    %c0_15 = arith.constant 0 : index
    %c0_16 = arith.constant 0 : index
    %14 = vector.load %arg7[%c0_15, %c0_16] : memref<1x128xf32, #tpu.memory_space<vmem>>, vector<1x128xf32>
    %15 = vector.broadcast %14 : vector<1x128xf32> to vector<32x128xf32>
    %16 = arith.addf %13, %15 : vector<32x128xf32>
    %c0_17 = arith.constant 0 : index
    %c0_18 = arith.constant 0 : index
    %17 = vector.load %arg8[%c0_17, %c0_18] : memref<32x128xf32, #tpu.memory_space<vmem>>, vector<32x128xf32>
    tpu.vector_store %arg8[%c0_17, %c0_18], %16 {strides = array<i32>} : memref<32x128xf32, #tpu.memory_space<vmem>>, vector<32x128xf32>,
    return
  }
  func.func @transform_0(%arg0: i32, %arg1: i32) -> (i32, i32) {
    %c2_i32 = arith.constant 2 : i32
    %0 = arith.muli %arg0, %c2_i32 : i32
    %1 = arith.addi %0, %arg1 : i32
    %c0_i32 = arith.constant 0 : i32
    %c0_i32_0 = arith.constant 0 : i32
    return %1, %c0_i32 : i32, i32
  }
  func.func @transform_1(%arg0: i32, %arg1: i32) -> (i32, i32) {
    %c0_i32 = arith.constant 0 : i32
    %c0_i32_0 = arith.constant 0 : i32
    %c0_i32_1 = arith.constant 0 : i32
    return %c0_i32, %c0_i32_0 : i32, i32
  }
  func.func @transform_2(%arg0: i32, %arg1: i32) -> (i32, i32) {
    %c0_i32 = arith.constant 0 : i32
    %c0_i32_0 = arith.constant 0 : i32
    %c0_i32_1 = arith.constant 0 : i32
    return %c0_i32, %c0_i32_0 : i32, i32
  }
  func.func @transform_3(%arg0: i32, %arg1: i32) -> (i32, i32) {
    %c0_i32 = arith.constant 0 : i32
    %c0_i32_0 = arith.constant 0 : i32
    %c0_i32_1 = arith.constant 0 : i32
    return %c0_i32, %c0_i32_0 : i32, i32
  }
  func.func @transform_4(%arg0: i32, %arg1: i32) -> (i32, i32) {
    %c0_i32 = arith.constant 0 : i32
    %c0_i32_0 = arith.constant 0 : i32
    %c0_i32_1 = arith.constant 0 : i32
    return %c0_i32, %c0_i32_0 : i32, i32
  }
  func.func @transform_5(%arg0: i32, %arg1: i32) -> (i32, i32) {
    %c0_i32 = arith.constant 0 : i32
    %c0_i32_0 = arith.constant 0 : i32
    %c0_i32_1 = arith.constant 0 : i32
    return %c0_i32, %c0_i32_0 : i32, i32
  }
  func.func @transform_6(%arg0: i32, %arg1: i32) -> (i32, i32) {
    %c2_i32 = arith.constant 2 : i32
    %0 = arith.muli %arg0, %c2_i32 : i32
    %1 = arith.addi %0, %arg1 : i32
    %c0_i32 = arith.constant 0 : i32
    %c0_i32_0 = arith.constant 0 : i32
    return %1, %c0_i32 : i32, i32
  }
}

</mosaic_0001>

<llo_original>
// kernel: tpu_custom_call.1
$region0: #{tpu_custom_call.1}
  #allocation0 [shape = 'u32[]', space=smem, size = 0x4, offset = 0x4, fixed_abs, tag = 'smem constant byte address 0x4 - core index']
  #allocation1 [shape = 'u32[144,128]{1,0:T(1,128)}', space=vmem, size = 0x12000, scoped, tag = 'internal scratch']
  #allocation2 [shape = 'f32[32,512]{1,0:T(8,128)}', space=vmem, size = 0x10000, scoped, tag = 'scratch operand']
  #allocation3 [shape = 'f32[32,128]{1,0:T(8,128)}', space=vmem, size = 0x4000, scoped, tag = 'scratch operand']
  #allocation4 [shape = 'f32[8,128]{1,0:T(8,128)}', space=vmem, size = 0x1000, scoped, tag = 'scratch operand']
  #allocation5 [shape = 'f32[8,128]{1,0:T(8,128)}', space=vmem, size = 0x1000, scoped, tag = 'scratch operand']
  %s0 = inlined_call_operand.vmem [shape: f32[64,32], index: 0, kind: input, shape index: {}]
  %s1 = inlined_call_operand.hbm [shape: f32[32,512], index: 1, kind: input, shape index: {}]
  %s2 = inlined_call_operand.hbm [shape: f32[128,512], index: 2, kind: input, shape index: {}]
  %s3 = inlined_call_operand.vmem [shape: f32[1,512], index: 3, kind: input, shape index: {}]
  %s4 = inlined_call_operand.hbm [shape: f32[128,128], index: 4, kind: input, shape index: {}]
  %s5 = inlined_call_operand.vmem [shape: f32[1,128], index: 5, kind: input, shape index: {}]
  %s6 = inlined_call_operand.hbm [shape: f32[64,128], index: 6, kind: output, shape index: {}]
  %s7 = sld [smem:[#allocation0]]
  $region80: #{tpu_custom_call.1} parent=0
    _
  %s9 = ssub.s32 1, %s7
  %s10 = scalar_select 0, %s9, %s7
  $region1: #{tpu_custom_call.1} parent=0
    #allocation6 [shape = 'u8[65536]{0}', space=vmem, size = 0x10000, scoped, tag = 'input window, operand 1, single buffered']
    #allocation7 [shape = 's32[2]{0}', space=sflag, size = 0x8, scoped, tag = 'scoped memory for tpu_custom_call.1']
    #allocation8 [shape = 's32[2]{0}', space=sflag, size = 0x8, scoped, tag = 'scoped memory for tpu_custom_call.1']
    #allocation9 [shape = 'u8[262144]{0}', space=vmem, size = 0x40000, scoped, tag = 'input window, operand 2, single buffered']
    #allocation10 [shape = 's32[1]{0}', space=sflag, size = 0x4, scoped, tag = 'scoped memory for tpu_custom_call.1']
    #allocation11 [shape = 'u8[65536]{0}', space=vmem, size = 0x10000, scoped, tag = 'input window, operand 4, single buffered']
    #allocation12 [shape = 'u8[32768]{0}', space=vmem, size = 0x8000, scoped, tag = 'output window, operand 0']
    %11 = vsyncpa [#allocation7], 0
    %12 = vsyncpa [#allocation10], 0
    %13 = vsyncpa [#allocation8], 0
    %s14 = scalar_lea.sflag [#allocation8], 1
    %15 = vsyncpa %s14, 0
    loop: start=0, step=1, limit=4
    $region2: #{tpu_custom_call.1} parent=1 // loop_pre_header
      _
    $region3: #{tpu_custom_call.1} parent=1 // loop_header
      %s17 = sphi 0, %s21
      %p18 = scmp.ge.s32.totalorder %s17, 4
      %s24 = sphi 0, %s36
      %s25 = sphi 0, %s32
      %s26 = sphi 0, %s24
      %s27 = sphi 0, %s25
      %s28 = sphi 0, %s26
      %s29 = sphi 0, %s27
      %s43 = sphi 0, %s45
      %s46 = sphi 0, %s43
      %s47 = sphi 0, %s46
      %s63 = sphi 0, %s47
      %s67 = sphi 0, %s67
      %s69 = sphi 0, %s67
      %s70 = sphi 0, %s69
      %s84 = sphi 0, %s70
      %s88 = sphi 0, %s88
      %s90 = sphi 0, %s88
      %s91 = sphi 0, %s90
      %s105 = sphi 0, %s91
      %s109 = sphi 0, %s109
      %s111 = sphi 0, %s109
      %s112 = sphi 0, %s111
      %s126 = sphi 0, %s112
      %s130 = sphi 0, %s130
      %s132 = sphi 0, %s130
      %s133 = sphi 0, %s132
      %s147 = sphi 0, %s133
      %s151 = sphi 0, %s151
      %s153 = sphi 0, %s151
      %s154 = sphi 0, %s153
      %s168 = sphi 0, %s154
      %s178 = sphi 0, %s180
      %s181 = sphi 0, %s178
      %s182 = sphi 0, %s181
      %s198 = sphi 0, %s182
    $region4: #{tpu_custom_call.1} parent=1 // loop_header_branch
      %20 = sbr.rel (%p18) target = $region8
    $region5: #{tpu_custom_call.1} parent=1 // loop_body
      %s22 = ssub.s32 %s17, 1
      %s23 = ssub.s32 %s17, 2
      %s30 = sadd.s32 1, %s25
      %p31 = scmp.ge.s32.totalorder %s30, 2
      %s32 = scalar_select %p31, 0, %s30
      %s33 = sadd.s32 1, %s24
      %s34 = scalar_select %p31, %s33, %s24
      %p35 = scmp.ge.s32.totalorder %s34, 1
      %s36 = scalar_select %p35, 0, %s34
      %s37 = smul.u32 %s24, 2
      %s38 = sadd.s32 %s37, %s25
      %s39 = smul.u32 %s36, 2
      %s40 = sadd.s32 %s39, %s32
      %s41 = ssub.s32 %s38, %s40
      %p42 = scmp.eq.s32.totalorder %s41, 0
      %s44 = sadd.s32 %s43, 1
      %s45 = scalar_select %p42, %s43, %s44
      %p48 = pneg %p42
      %p49 = scmp.eq.s32.totalorder %s17, 1
      %p50 = por %p48, %p49
      %p51 = scmp.ne.s32.totalorder %s43, %s46
      %p52 = scmp.eq.s32.totalorder %s17, 0
      %p53 = por %p51, %p52
      %p54 = scmp.ne.s32.totalorder %s43, %s46
      %p55 = scmp.eq.s32.totalorder %s22, 1
      %p56 = por %p54, %p55
      %p57 = scmp.ne.s32.totalorder %s46, %s47
      %p58 = scmp.eq.s32.totalorder %s22, 0
      %p59 = por %p57, %p58
      %p60 = scmp.ne.s32.totalorder %s46, %s47
      %p61 = scmp.eq.s32.totalorder %s23, 1
      %p62 = por %p60, %p61
      %p64 = scmp.ne.s32.totalorder %s47, %s63
      %p65 = scmp.eq.s32.totalorder %s23, 0
      %p66 = por %p64, %p65
      %s68 = sadd.s32 %s67, 1
      %p71 = scmp.eq.s32.totalorder %s17, 1
      %p72 = scmp.ne.s32.totalorder %s67, %s69
      %p73 = scmp.eq.s32.totalorder %s17, 0
      %p74 = por %p72, %p73
      %p75 = scmp.ne.s32.totalorder %s67, %s69
      %p76 = scmp.eq.s32.totalorder %s22, 1
      %p77 = por %p75, %p76
      %p78 = scmp.ne.s32.totalorder %s69, %s70
      %p79 = scmp.eq.s32.totalorder %s22, 0
      %p80 = por %p78, %p79
      %p81 = scmp.ne.s32.totalorder %s69, %s70
      %p82 = scmp.eq.s32.totalorder %s23, 1
      %p83 = por %p81, %p82
      %p85 = scmp.ne.s32.totalorder %s70, %s84
      %p86 = scmp.eq.s32.totalorder %s23, 0
      %p87 = por %p85, %p86
      %s89 = sadd.s32 %s88, 1
      %p92 = scmp.eq.s32.totalorder %s17, 1
      %p93 = scmp.ne.s32.totalorder %s88, %s90
      %p94 = scmp.eq.s32.totalorder %s17, 0
      %p95 = por %p93, %p94
      %p96 = scmp.ne.s32.totalorder %s88, %s90
      %p97 = scmp.eq.s32.totalorder %s22, 1
      %p98 = por %p96, %p97
      %p99 = scmp.ne.s32.totalorder %s90, %s91
      %p100 = scmp.eq.s32.totalorder %s22, 0
      %p101 = por %p99, %p100
      %p102 = scmp.ne.s32.totalorder %s90, %s91
      %p103 = scmp.eq.s32.totalorder %s23, 1
      %p104 = por %p102, %p103
      %p106 = scmp.ne.s32.totalorder %s91, %s105
      %p107 = scmp.eq.s32.totalorder %s23, 0
      %p108 = por %p106, %p107
      %s110 = sadd.s32 %s109, 1
      %p113 = scmp.eq.s32.totalorder %s17, 1
      %p114 = scmp.ne.s32.totalorder %s109, %s111
      %p115 = scmp.eq.s32.totalorder %s17, 0
      %p116 = por %p114, %p115
      %p117 = scmp.ne.s32.totalorder %s109, %s111
      %p118 = scmp.eq.s32.totalorder %s22, 1
      %p119 = por %p117, %p118
      %p120 = scmp.ne.s32.totalorder %s111, %s112
      %p121 = scmp.eq.s32.totalorder %s22, 0
      %p122 = por %p120, %p121
      %p123 = scmp.ne.s32.totalorder %s111, %s112
      %p124 = scmp.eq.s32.totalorder %s23, 1
      %p125 = por %p123, %p124
      %p127 = scmp.ne.s32.totalorder %s112, %s126
      %p128 = scmp.eq.s32.totalorder %s23, 0
      %p129 = por %p127, %p128
      %s131 = sadd.s32 %s130, 1
      %p134 = scmp.eq.s32.totalorder %s17, 1
      %p135 = scmp.ne.s32.totalorder %s130, %s132
      %p136 = scmp.eq.s32.totalorder %s17, 0
      %p137 = por %p135, %p136
      %p138 = scmp.ne.s32.totalorder %s130, %s132
      %p139 = scmp.eq.s32.totalorder %s22, 1
      %p140 = por %p138, %p139
      %p141 = scmp.ne.s32.totalorder %s132, %s133
      %p142 = scmp.eq.s32.totalorder %s22, 0
      %p143 = por %p141, %p142
      %p144 = scmp.ne.s32.totalorder %s132, %s133
      %p145 = scmp.eq.s32.totalorder %s23, 1
      %p146 = por %p144, %p145
      %p148 = scmp.ne.s32.totalorder %s133, %s147
      %p149 = scmp.eq.s32.totalorder %s23, 0
      %p150 = por %p148, %p149
      %s152 = sadd.s32 %s151, 1
      %p155 = scmp.eq.s32.totalorder %s17, 1
      %p156 = scmp.ne.s32.totalorder %s151, %s153
      %p157 = scmp.eq.s32.totalorder %s17, 0
      %p158 = por %p156, %p157
      %p159 = scmp.ne.s32.totalorder %s151, %s153
      %p160 = scmp.eq.s32.totalorder %s22, 1
      %p161 = por %p159, %p160
      %p162 = scmp.ne.s32.totalorder %s153, %s154
      %p163 = scmp.eq.s32.totalorder %s22, 0
      %p164 = por %p162, %p163
      %p165 = scmp.ne.s32.totalorder %s153, %s154
      %p166 = scmp.eq.s32.totalorder %s23, 1
      %p167 = por %p165, %p166
      %p169 = scmp.ne.s32.totalorder %s154, %s168
      %p170 = scmp.eq.s32.totalorder %s23, 0
      %p171 = por %p169, %p170
      %s172 = smul.u32 %s24, 2
      %s173 = sadd.s32 %s172, %s25
      %s174 = smul.u32 %s36, 2
      %s175 = sadd.s32 %s174, %s32
      %s176 = ssub.s32 %s173, %s175
      %p177 = scmp.eq.s32.totalorder %s176, 0
      %s179 = sadd.s32 %s178, 1
      %s180 = scalar_select %p177, %s178, %s179
      %p183 = pneg %p177
      %p184 = scmp.eq.s32.totalorder %s17, 1
      %p185 = por %p183, %p184
      %p186 = scmp.ne.s32.totalorder %s178, %s181
      %p187 = scmp.eq.s32.totalorder %s17, 0
      %p188 = por %p186, %p187
      %p189 = scmp.ne.s32.totalorder %s178, %s181
      %p190 = scmp.eq.s32.totalorder %s22, 1
      %p191 = por %p189, %p190
      %p192 = scmp.ne.s32.totalorder %s181, %s182
      %p193 = scmp.eq.s32.totalorder %s22, 0
      %p194 = por %p192, %p193
      %p195 = scmp.ne.s32.totalorder %s181, %s182
      %p196 = scmp.eq.s32.totalorder %s23, 1
      %p197 = por %p195, %p196
      %p199 = scmp.ne.s32.totalorder %s182, %s198
      %p200 = scmp.eq.s32.totalorder %s23, 0
      %p201 = por %p199, %p200
      %p202 = scmp.le.s32.totalorder 1, %s17
      %p203 = scmp.lt.s32.totalorder %s17, 3
      %p204 = pnand %p202, %p203
      %p205 = pneg %p204
      // Predicated region
      $region9: #{tpu_custom_call.1} parent=5 // pred_check
        _
      $region10: #{tpu_custom_call.1} parent=5 // pred_check_branch
        %207 = sbr.rel (%p204) target = $region12
      $region11: #{tpu_custom_call.1} parent=5 // pred_region
        %s208 = ssub.s32 %s17, 1
        // Predicated region
        $region13: #{tpu_custom_call.1} parent=11 // pred_check
          %p209 = pneg %p80
        $region14: #{tpu_custom_call.1} parent=11 // pred_check_branch
          %211 = sbr.rel (%p209) target = $region16
        $region15: #{tpu_custom_call.1} parent=11 // pred_region
          %s213 = ssub.s32 2048, 2048
          %214 = vsyncadd [#allocation7], %s213
          %s215 = sshll.u32 [#allocation6], 4
          %s216 = int_to_ptr.vmem [resolvable:$true] %s215
          %221 = dma.hbm_to_vmem [thread:$0]  %s1, 2048, %s216, [#allocation7], 512, 512, 32
        $region16: #{tpu_custom_call.1} parent=11 // pred_fallthru
          _
        // Predicated region
        $region17: #{tpu_custom_call.1} parent=11 // pred_check
          %p222 = pneg %p101
        $region18: #{tpu_custom_call.1} parent=11 // pred_check_branch
          %224 = sbr.rel (%p222) target = $region20
        $region19: #{tpu_custom_call.1} parent=11 // pred_region
          %s226 = ssub.s32 8192, 8192
          %227 = vsyncadd [#allocation10], %s226
          %s228 = sshll.u32 [#allocation9], 4
          %s229 = int_to_ptr.vmem [resolvable:$true] %s228
          %234 = dma.hbm_to_vmem [thread:$0]  %s2, 8192, %s229, [#allocation10], 512, 512, 32
        $region20: #{tpu_custom_call.1} parent=11 // pred_fallthru
          _
        // Predicated region
        $region21: #{tpu_custom_call.1} parent=11 // pred_check
          %p235 = pneg %p122
        $region22: #{tpu_custom_call.1} parent=11 // pred_check_branch
          %237 = sbr.rel (%p235) target = $region24
        $region23: #{tpu_custom_call.1} parent=11 // pred_region
          _
        $region24: #{tpu_custom_call.1} parent=11 // pred_fallthru
          _
        // Predicated region
        $region25: #{tpu_custom_call.1} parent=11 // pred_check
          %p238 = pneg %p143
        $region26: #{tpu_custom_call.1} parent=11 // pred_check_branch
          %240 = sbr.rel (%p238) target = $region28
        $region27: #{tpu_custom_call.1} parent=11 // pred_region
          %s242 = ssub.s32 2048, 2048
          %243 = vsyncadd [#allocation10], %s242
          %s244 = sshll.u32 [#allocation11], 4
          %s245 = int_to_ptr.vmem [resolvable:$true] %s244
          %250 = dma.hbm_to_vmem [thread:$0]  %s4, 2048, %s245, [#allocation10], 128, 128, 8
        $region28: #{tpu_custom_call.1} parent=11 // pred_fallthru
          _
        // Predicated region
        $region29: #{tpu_custom_call.1} parent=11 // pred_check
          %p251 = pneg %p164
        $region30: #{tpu_custom_call.1} parent=11 // pred_check_branch
          %253 = sbr.rel (%p251) target = $region32
        $region31: #{tpu_custom_call.1} parent=11 // pred_region
          _
        $region32: #{tpu_custom_call.1} parent=11 // pred_fallthru
          _
      $region12: #{tpu_custom_call.1} parent=5 // pred_fallthru
        _
      %p254 = scmp.lt.s32.totalorder %s17, 2
      // Predicated region
      $region33: #{tpu_custom_call.1} parent=5 // pred_check
        %p255 = pneg %p254
      $region34: #{tpu_custom_call.1} parent=5 // pred_check_branch
        %257 = sbr.rel (%p255) target = $region36
      $region35: #{tpu_custom_call.1} parent=5 // pred_region
        // Predicated region
        $region37: #{tpu_custom_call.1} parent=35 // pred_check
          %p258 = pneg %p53
        $region38: #{tpu_custom_call.1} parent=35 // pred_check_branch
          %260 = sbr.rel (%p258) target = $region40
        $region39: #{tpu_custom_call.1} parent=35 // pred_region
          %s261 = smul.u32 %s24, 2
          %s262 = sadd.s32 %s261, %s25
          %s263 = smul.u32 4, %s262
          %p264 = scmp.lt.s32.totalorder %s263, 7
          %s265 = scalar_select %p264, %s263, 7
          %s266 = smul.addr %s265, 8
          %s267 = scalar_lea.vmem %s0, %s266
          %s268 = smul.u32 %s24, 2
          %s269 = sadd.s32 %s268, %s25
          %s270 = smul.u32 4, %s269
        $region40: #{tpu_custom_call.1} parent=35 // pred_fallthru
          _
      $region36: #{tpu_custom_call.1} parent=5 // pred_fallthru
        _
      %p271 = scmp.le.s32.totalorder 1, %s17
      %p272 = scmp.lt.s32.totalorder %s17, 3
      %p273 = pnand %p271, %p272
      %p274 = pneg %p273
      // Predicated region
      $region41: #{tpu_custom_call.1} parent=5 // pred_check
        _
      $region42: #{tpu_custom_call.1} parent=5 // pred_check_branch
        %276 = sbr.rel (%p273) target = $region44
      $region43: #{tpu_custom_call.1} parent=5 // pred_region
        %s277 = ssub.s32 %s17, 1
        // Predicated region
        $region45: #{tpu_custom_call.1} parent=43 // pred_check
          %p278 = pneg %p80
        $region46: #{tpu_custom_call.1} parent=43 // pred_check_branch
          %280 = sbr.rel (%p278) target = $region48
        $region47: #{tpu_custom_call.1} parent=43 // pred_region
          %281 = dma.done [#allocation7], 2048
        $region48: #{tpu_custom_call.1} parent=43 // pred_fallthru
          _
        // Predicated region
        $region49: #{tpu_custom_call.1} parent=43 // pred_check
          %p282 = pneg %p101
        $region50: #{tpu_custom_call.1} parent=43 // pred_check_branch
          %284 = sbr.rel (%p282) target = $region52
        $region51: #{tpu_custom_call.1} parent=43 // pred_region
          %285 = dma.done [#allocation10], 8192
        $region52: #{tpu_custom_call.1} parent=43 // pred_fallthru
          _
        // Predicated region
        $region53: #{tpu_custom_call.1} parent=43 // pred_check
          %p286 = pneg %p143
        $region54: #{tpu_custom_call.1} parent=43 // pred_check_branch
          %288 = sbr.rel (%p286) target = $region56
        $region55: #{tpu_custom_call.1} parent=43 // pred_region
          %289 = dma.done [#allocation10], 2048
        $region56: #{tpu_custom_call.1} parent=43 // pred_fallthru
          _
        %s290 = smul.u32 %s26, 2
        %s291 = sadd.s32 %s290, %s27
        %s292 = smul.u32 4, %s291
        %p293 = scmp.lt.s32.totalorder %s292, 7
        %s294 = scalar_select %p293, %s292, 7
        %s295 = smul.addr %s294, 8
        %s296 = scalar_lea.vmem %s0, %s295
        %p297 = pneg %p59
        %p298 = pneg %p56
        %p299 = pneg %p80
        %p300 = pneg %p77
        %p301 = pneg %p101
        %p302 = pneg %p98
        %p303 = pneg %p122
        %p304 = pneg %p119
        %p305 = pneg %p143
        %p306 = pneg %p140
        %p307 = pneg %p164
        %p308 = pneg %p161
        %p309 = pneg %p194
        %p310 = pneg %p191
        %s311 = sand.u32 %s181, 1
        %s312 = scalar_lea.sflag [#allocation8], %s311
        %s313 = sand.u32 %s181, 1
        %s314 = smul.addr %s313, 32
        %s315 = scalar_lea.vmem [#allocation12], %s314
        %s316 = smul.u32 %s26, 2
        %s317 = sadd.s32 %s316, %s27
        %s318 = smul.u32 4, %s317
        %p319 = scmp.lt.s32.totalorder %s318, 7
        %s320 = scalar_select %p319, %s318, 7
        %s321 = smul.addr %s320, 8
        %s322 = scalar_lea.vmem %s0, %s321
        %s323 = smul.u32 %s26, 2
        %s324 = sadd.s32 %s323, %s27
        %s325 = smul.u32 4, %s324
        %s326 = smul.u32 %s26, 2
        %s327 = sadd.s32 %s326, %s27
        %s328 = smul.u32 4, %s327
        %p329 = scmp.eq.s32.totalorder %s27, 0
        // Predicated region
        $region57: #{tpu_custom_call.1} parent=43 // pred_check
          %p330 = pneg %p329
        $region58: #{tpu_custom_call.1} parent=43 // pred_check_branch
          %332 = sbr.rel (%p330) target = $region60
        $region59: #{tpu_custom_call.1} parent=43 // pred_region
          %333 = vst [vmem:[#allocation4] sm:$0xff] 0.0
          %334 = vst [vmem:[#allocation5] sm:$0xff] 0.0
        $region60: #{tpu_custom_call.1} parent=43 // pred_fallthru
          _
        %v335 = vld [vmem:[%s322] sm:$0xff]
        %v336 = vld [vmem:[%s322 + $0x8] sm:$0xff]
        %v337 = vld [vmem:[%s322 + $0x10] sm:$0xff]
        %v338 = vld [vmem:[%s322 + $0x18] sm:$0xff]
        %v339 = vld [vmem:[#allocation6] sm:$0xff]
        %v340 = vld [vmem:[#allocation6 + $0x8] sm:$0xff]
        %v341 = vld [vmem:[#allocation6 + $0x10] sm:$0xff]
        %v342 = vld [vmem:[#allocation6 + $0x18] sm:$0xff]
        %v343 = vld [vmem:[#allocation6 + $0x20] sm:$0xff]
        %v344 = vld [vmem:[#allocation6 + $0x28] sm:$0xff]
        %v345 = vld [vmem:[#allocation6 + $0x30] sm:$0xff]
        %v346 = vld [vmem:[#allocation6 + $0x38] sm:$0xff]
        %v347 = vld [vmem:[#allocation6 + $0x40] sm:$0xff]
        %v348 = vld [vmem:[#allocation6 + $0x48] sm:$0xff]
        %v349 = vld [vmem:[#allocation6 + $0x50] sm:$0xff]
        %v350 = vld [vmem:[#allocation6 + $0x58] sm:$0xff]
        %v351 = vld [vmem:[#allocation6 + $0x60] sm:$0xff]
        %v352 = vld [vmem:[#allocation6 + $0x68] sm:$0xff]
        %v353 = vld [vmem:[#allocation6 + $0x70] sm:$0xff]
        %v354 = vld [vmem:[#allocation6 + $0x78] sm:$0xff]
        %v355 = vld [vmem:[%s3] sm:$0xf]
        %v357 = vlaneseq
        %v358 = vshrl.u32 %v357, 7
        %v359 = vsub.s32 0, %v358
        %v360 = vrot.slane %v355, %v359
        %v361 = vlaneseq
        %v362 = vshrl.u32 %v361, 7
        %v363 = vsub.s32 1, %v362
        %v364 = vrot.slane %v355, %v363
        %v365 = vlaneseq
        %v366 = vshrl.u32 %v365, 7
        %v367 = vsub.s32 2, %v366
        %v368 = vrot.slane %v355, %v367
        %v369 = vlaneseq
        %v370 = vshrl.u32 %v369, 7
        %v371 = vsub.s32 3, %v370
        %v372 = vrot.slane %v355, %v371
        %vm377 = vcmask 261120
        %v379 = vsel %vm377, %v335, 0
        %v382 = vsel %vm377, %v336, 0
        %v385 = vsel %vm377, %v337, 0
        %v388 = vsel %vm377, %v338, 0
        %390 = vmatprep.subr.mxu0 %v340
        %391 = vmatpush1.msra.mxu0 %v339
        %392 = vmatprep.subr.mxu0 %v344
        %393 = vmatpush1.msra.mxu0 %v343
        %394 = vmatprep.subr.mxu0 %v348
        %395 = vmatpush1.msra.mxu0 %v347
        %396 = vmatprep.subr.mxu0 %v352
        %397 = vmatpush1.msra.mxu0 %v351
        %398 = vmatprep.subr.mxu0 0.0
        %399 = vmatpush1.msra.mxu0 0.0
        %400 = vmatprep.subr.mxu0 0.0
        %401 = vmatpush1.msra.mxu0 0.0
        %402 = vmatprep.subr.mxu0 0.0
        %403 = vmatpush1.msra.mxu0 0.0
        %404 = vmatprep.subr.mxu0 0.0
        %405 = vmatpush1.msra.mxu0 0.0
        %406 = vmatprep.subr.mxu0 0.0
        %407 = vmatpush1.msra.mxu0 0.0
        %408 = vmatprep.subr.mxu0 0.0
        %409 = vmatpush1.msra.mxu0 0.0
        %410 = vmatprep.subr.mxu0 0.0
        %411 = vmatpush1.msra.mxu0 0.0
        %412 = vmatprep.subr.mxu0 0.0
        %413 = vmatpush1.msra.mxu0 0.0
        %414 = vmatprep.subr.mxu0 0.0
        %415 = vmatpush1.msra.mxu0 0.0
        %416 = vmatprep.subr.mxu0 0.0
        %417 = vmatpush1.msra.mxu0 0.0
        %418 = vmatprep.subr.mxu0 0.0
        %419 = vmatpush1.msra.mxu0 0.0
        %420 = vmatprep.subr.mxu0 0.0
        %421 = vmatpush1.msra.mxu0 0.0
        %422 = vmatprep.subr.mxu0 0.0
        %423 = vmatpush1.msra.mxu0 0.0
        %424 = vmatprep.subr.mxu0 0.0
        %425 = vmatpush1.msra.mxu0 0.0
        %426 = vmatprep.subr.mxu0 0.0
        %427 = vmatpush1.msra.mxu0 0.0
        %428 = vmatprep.subr.mxu0 0.0
        %429 = vmatpush1.msra.mxu0 0.0
        %430 = vmatprep.subr.mxu0 0.0
        %431 = vmatpush1.msra.mxu0 0.0
        %432 = vmatprep.subr.mxu0 0.0
        %433 = vmatpush1.msra.mxu0 0.0
        %434 = vmatprep.subr.mxu0 0.0
        %435 = vmatpush1.msra.mxu0 0.0
        %436 = vmatprep.subr.mxu0 0.0
        %437 = vmatpush1.msra.mxu0 0.0
        %438 = vmatprep.subr.mxu0 0.0
        %439 = vmatpush1.msra.mxu0 0.0
        %440 = vmatprep.subr.mxu0 0.0
        %441 = vmatpush1.msra.mxu0 0.0
        %442 = vmatprep.subr.mxu0 0.0
        %443 = vmatpush1.msra.mxu0 0.0
        %444 = vmatprep.subr.mxu0 0.0
        %445 = vmatpush1.msra.mxu0 0.0
        %446 = vmatprep.subr.mxu0 0.0
        %447 = vmatpush1.msra.mxu0 0.0
        %448 = vmatprep.subr.mxu0 0.0
        %449 = vmatpush1.msra.mxu0 0.0
        %450 = vmatprep.subr.mxu0 0.0
        %451 = vmatpush1.msra.mxu0 0.0
        %452 = vmatprep.subr.mxu0 0.0
        %453 = vmatpush1.msra.mxu0 0.0
        %454 = vmatprep.mubr.f32.mxu0 0.0
        %455 = vmatmul.mubr.f32.gmra.mrb[0].mxu0 %v379
        %v456 = vpop.f32.mrb[0].mxu0
        %v457 = vadd.f32 %v360, %v456
        %v458 = vpop.f32.mrb[0].mxu0
        %v459 = vadd.f32 %v364, %v458
        %460 = vmatprep.mubr.f32.mxu0 0.0
        %461 = vmatmul.mubr.f32.gmra.mrb[0].mxu0 %v382
        %v462 = vpop.f32.mrb[0].mxu0
        %v463 = vadd.f32 %v360, %v462
        %v464 = vpop.f32.mrb[0].mxu0
        %v465 = vadd.f32 %v364, %v464
        %466 = vmatprep.mubr.f32.mxu0 0.0
        %467 = vmatmul.mubr.f32.gmra.mrb[0].mxu0 %v385
        %v468 = vpop.f32.mrb[0].mxu0
        %v469 = vadd.f32 %v360, %v468
        %v470 = vpop.f32.mrb[0].mxu0
        %v471 = vadd.f32 %v364, %v470
        %472 = vmatprep.mubr.f32.mxu0 0.0
        %473 = vmatmul.mubr.f32.gmra.mrb[0].mxu0 %v388
        %v474 = vpop.f32.mrb[0].mxu0
        %v475 = vadd.f32 %v360, %v474
        %v476 = vpop.f32.mrb[0].mxu0
        %v477 = vadd.f32 %v364, %v476
        %478 = vdwg.mxu0
        %479 = vmatprep.subr.mxu0 %v342
        %480 = vmatpush1.msra.mxu0 %v341
        %481 = vmatprep.subr.mxu0 %v346
        %482 = vmatpush1.msra.mxu0 %v345
        %483 = vmatprep.subr.mxu0 %v350
        %484 = vmatpush1.msra.mxu0 %v349
        %485 = vmatprep.subr.mxu0 %v354
        %486 = vmatpush1.msra.mxu0 %v353
        %487 = vmatprep.subr.mxu0 0.0
        %488 = vmatpush1.msra.mxu0 0.0
        %489 = vmatprep.subr.mxu0 0.0
        %490 = vmatpush1.msra.mxu0 0.0
        %491 = vmatprep.subr.mxu0 0.0
        %492 = vmatpush1.msra.mxu0 0.0
        %493 = vmatprep.subr.mxu0 0.0
        %494 = vmatpush1.msra.mxu0 0.0
        %495 = vmatprep.subr.mxu0 0.0
        %496 = vmatpush1.msra.mxu0 0.0
        %497 = vmatprep.subr.mxu0 0.0
        %498 = vmatpush1.msra.mxu0 0.0
        %499 = vmatprep.subr.mxu0 0.0
        %500 = vmatpush1.msra.mxu0 0.0
        %501 = vmatprep.subr.mxu0 0.0
        %502 = vmatpush1.msra.mxu0 0.0
        %503 = vmatprep.subr.mxu0 0.0
        %504 = vmatpush1.msra.mxu0 0.0
        %505 = vmatprep.subr.mxu0 0.0
        %506 = vmatpush1.msra.mxu0 0.0
        %507 = vmatprep.subr.mxu0 0.0
        %508 = vmatpush1.msra.mxu0 0.0
        %509 = vmatprep.subr.mxu0 0.0
        %510 = vmatpush1.msra.mxu0 0.0
        %511 = vmatprep.subr.mxu0 0.0
        %512 = vmatpush1.msra.mxu0 0.0
        %513 = vmatprep.subr.mxu0 0.0
        %514 = vmatpush1.msra.mxu0 0.0
        %515 = vmatprep.subr.mxu0 0.0
        %516 = vmatpush1.msra.mxu0 0.0
        %517 = vmatprep.subr.mxu0 0.0
        %518 = vmatpush1.msra.mxu0 0.0
        %519 = vmatprep.subr.mxu0 0.0
        %520 = vmatpush1.msra.mxu0 0.0
        %521 = vmatprep.subr.mxu0 0.0
        %522 = vmatpush1.msra.mxu0 0.0
        %523 = vmatprep.subr.mxu0 0.0
        %524 = vmatpush1.msra.mxu0 0.0
        %525 = vmatprep.subr.mxu0 0.0
        %526 = vmatpush1.msra.mxu0 0.0
        %527 = vmatprep.subr.mxu0 0.0
        %528 = vmatpush1.msra.mxu0 0.0
        %529 = vmatprep.subr.mxu0 0.0
        %530 = vmatpush1.msra.mxu0 0.0
        %531 = vmatprep.subr.mxu0 0.0
        %532 = vmatpush1.msra.mxu0 0.0
        %533 = vmatprep.subr.mxu0 0.0
        %534 = vmatpush1.msra.mxu0 0.0
        %535 = vmatprep.subr.mxu0 0.0
        %536 = vmatpush1.msra.mxu0 0.0
        %537 = vmatprep.subr.mxu0 0.0
        %538 = vmatpush1.msra.mxu0 0.0
        %539 = vmatprep.subr.mxu0 0.0
        %540 = vmatpush1.msra.mxu0 0.0
        %541 = vmatprep.subr.mxu0 0.0
        %542 = vmatpush1.msra.mxu0 0.0
        %543 = vmatprep.mubr.f32.mxu0 0.0
        %544 = vmatmul.mubr.f32.gmra.mrb[0].mxu0 %v379
        %v545 = vpop.f32.mrb[0].mxu0
        %v546 = vadd.f32 %v368, %v545
        %v547 = vpop.f32.mrb[0].mxu0
        %v548 = vadd.f32 %v372, %v547
        %549 = vmatprep.mubr.f32.mxu0 0.0
        %550 = vmatmul.mubr.f32.gmra.mrb[0].mxu0 %v382
        %v551 = vpop.f32.mrb[0].mxu0
        %v552 = vadd.f32 %v368, %v551
        %v553 = vpop.f32.mrb[0].mxu0
        %v554 = vadd.f32 %v372, %v553
        %555 = vmatprep.mubr.f32.mxu0 0.0
        %556 = vmatmul.mubr.f32.gmra.mrb[0].mxu0 %v385
        %v557 = vpop.f32.mrb[0].mxu0
        %v558 = vadd.f32 %v368, %v557
        %v559 = vpop.f32.mrb[0].mxu0
        %v560 = vadd.f32 %v372, %v559
        %561 = vmatprep.mubr.f32.mxu0 0.0
        %562 = vmatmul.mubr.f32.gmra.mrb[0].mxu0 %v388
        %v563 = vpop.f32.mrb[0].mxu0
        %v564 = vadd.f32 %v368, %v563
        %v565 = vpop.f32.mrb[0].mxu0
        %v566 = vadd.f32 %v372, %v565
        %567 = vdwg.mxu0
        %568 = vst [vmem:[#allocation2] sm:$0xff] %v457
        %569 = vst [vmem:[#allocation2 + $0x8] sm:$0xff] %v459
        %570 = vst [vmem:[#allocation2 + $0x10] sm:$0xff] %v546
        %571 = vst [vmem:[#allocation2 + $0x18] sm:$0xff] %v548
        %572 = vst [vmem:[#allocation2 + $0x20] sm:$0xff] %v463
        %573 = vst [vmem:[#allocation2 + $0x28] sm:$0xff] %v465
        %574 = vst [vmem:[#allocation2 + $0x30] sm:$0xff] %v552
        %575 = vst [vmem:[#allocation2 + $0x38] sm:$0xff] %v554
        %576 = vst [vmem:[#allocation2 + $0x40] sm:$0xff] %v469
        %577 = vst [vmem:[#allocation2 + $0x48] sm:$0xff] %v471
        %578 = vst [vmem:[#allocation2 + $0x50] sm:$0xff] %v558
        %579 = vst [vmem:[#allocation2 + $0x58] sm:$0xff] %v560
        %580 = vst [vmem:[#allocation2 + $0x60] sm:$0xff] %v475
        %581 = vst [vmem:[#allocation2 + $0x68] sm:$0xff] %v477
        %582 = vst [vmem:[#allocation2 + $0x70] sm:$0xff] %v564
        %583 = vst [vmem:[#allocation2 + $0x78] sm:$0xff] %v566
        loop: start=0, step=1, limit=2
        $region61: #{tpu_custom_call.1} parent=43 // loop_pre_header
          _
        $region62: #{tpu_custom_call.1} parent=43 // loop_header
          %s585 = sphi 0, %s589
          %p586 = scmp.ge.s32.totalorder %s585, 2
        $region63: #{tpu_custom_call.1} parent=43 // loop_header_branch
          %588 = sbr.rel (%p586) target = $region67
        $region64: #{tpu_custom_call.1} parent=43 // loop_body
          %v590 = vld [vmem:[#allocation4] sm:$0xff]
          %v591 = vld [vmem:[#allocation5] sm:$0xff]
          %s592 = smul.u32 %s585, 16
          %s593 = sshra.s32 %s592, 3
          %s594 = sand.u32 %s592, 7
          %s595 = smul.u32 %s593, 4
          %s596 = smul.addr %s595, 8
          %s597 = scalar_lea.vmem [#allocation2], %s596
          %v598 = vld [vmem:[%s597] sm:$0xff]
          %v599 = vld [vmem:[%s597 + $0x8] sm:$0xff]
          %v600 = vld [vmem:[%s597 + $0x10] sm:$0xff]
          %v601 = vld [vmem:[%s597 + $0x18] sm:$0xff]
          %v602 = vld [vmem:[#allocation9] sm:$0xff]
          %v603 = vld [vmem:[#allocation9 + $0x8] sm:$0xff]
          %v604 = vld [vmem:[#allocation9 + $0x10] sm:$0xff]
          %v605 = vld [vmem:[#allocation9 + $0x18] sm:$0xff]
          %v606 = vld [vmem:[#allocation9 + $0x20] sm:$0xff]
          %v607 = vld [vmem:[#allocation9 + $0x28] sm:$0xff]
          %v608 = vld [vmem:[#allocation9 + $0x30] sm:$0xff]
          %v609 = vld [vmem:[#allocation9 + $0x38] sm:$0xff]
          %v610 = vld [vmem:[#allocation9 + $0x40] sm:$0xff]
          %v611 = vld [vmem:[#allocation9 + $0x48] sm:$0xff]
          %v612 = vld [vmem:[#allocation9 + $0x50] sm:$0xff]
          %v613 = vld [vmem:[#allocation9 + $0x58] sm:$0xff]
          %v614 = vld [vmem:[#allocation9 + $0x60] sm:$0xff]
          %v615 = vld [vmem:[#allocation9 + $0x68] sm:$0xff]
          %v616 = vld [vmem:[#allocation9 + $0x70] sm:$0xff]
          %v617 = vld [vmem:[#allocation9 + $0x78] sm:$0xff]
          %v618 = vld [vmem:[#allocation9 + $0x80] sm:$0xff]
          %v619 = vld [vmem:[#allocation9 + $0x88] sm:$0xff]
          %v620 = vld [vmem:[#allocation9 + $0x90] sm:$0xff]
          %v621 = vld [vmem:[#allocation9 + $0x98] sm:$0xff]
          %v622 = vld [vmem:[#allocation9 + $0xa0] sm:$0xff]
          %v623 = vld [vmem:[#allocation9 + $0xa8] sm:$0xff]
          %v624 = vld [vmem:[#allocation9 + $0xb0] sm:$0xff]
          %v625 = vld [vmem:[#allocation9 + $0xb8] sm:$0xff]
          %v626 = vld [vmem:[#allocation9 + $0xc0] sm:$0xff]
          %v627 = vld [vmem:[#allocation9 + $0xc8] sm:$0xff]
          %v628 = vld [vmem:[#allocation9 + $0xd0] sm:$0xff]
          %v629 = vld [vmem:[#allocation9 + $0xd8] sm:$0xff]
          %v630 = vld [vmem:[#allocation9 + $0xe0] sm:$0xff]
          %v631 = vld [vmem:[#allocation9 + $0xe8] sm:$0xff]
          %v632 = vld [vmem:[#allocation9 + $0xf0] sm:$0xff]
          %v633 = vld [vmem:[#allocation9 + $0xf8] sm:$0xff]
          %v634 = vld [vmem:[#allocation9 + $0x100] sm:$0xff]
          %v635 = vld [vmem:[#allocation9 + $0x108] sm:$0xff]
          %v636 = vld [vmem:[#allocation9 + $0x110] sm:$0xff]
          %v637 = vld [vmem:[#allocation9 + $0x118] sm:$0xff]
          %v638 = vld [vmem:[#allocation9 + $0x120] sm:$0xff]
          %v639 = vld [vmem:[#allocation9 + $0x128] sm:$0xff]
          %v640 = vld [vmem:[#allocation9 + $0x130] sm:$0xff]
          %v641 = vld [vmem:[#allocation9 + $0x138] sm:$0xff]
          %v642 = vld [vmem:[#allocation9 + $0x140] sm:$0xff]
          %v643 = vld [vmem:[#allocation9 + $0x148] sm:$0xff]
          %v644 = vld [vmem:[#allocation9 + $0x150] sm:$0xff]
          %v645 = vld [vmem:[#allocation9 + $0x158] sm:$0xff]
          %v646 = vld [vmem:[#allocation9 + $0x160] sm:$0xff]
          %v647 = vld [vmem:[#allocation9 + $0x168] sm:$0xff]
          %v648 = vld [vmem:[#allocation9 + $0x170] sm:$0xff]
          %v649 = vld [vmem:[#allocation9 + $0x178] sm:$0xff]
          %v650 = vld [vmem:[#allocation9 + $0x180] sm:$0xff]
          %v651 = vld [vmem:[#allocation9 + $0x188] sm:$0xff]
          %v652 = vld [vmem:[#allocation9 + $0x190] sm:$0xff]
          %v653 = vld [vmem:[#allocation9 + $0x198] sm:$0xff]
          %v654 = vld [vmem:[#allocation9 + $0x1a0] sm:$0xff]
          %v655 = vld [vmem:[#allocation9 + $0x1a8] sm:$0xff]
          %v656 = vld [vmem:[#allocation9 + $0x1b0] sm:$0xff]
          %v657 = vld [vmem:[#allocation9 + $0x1b8] sm:$0xff]
          %v658 = vld [vmem:[#allocation9 + $0x1c0] sm:$0xff]
          %v659 = vld [vmem:[#allocation9 + $0x1c8] sm:$0xff]
          %v660 = vld [vmem:[#allocation9 + $0x1d0] sm:$0xff]
          %v661 = vld [vmem:[#allocation9 + $0x1d8] sm:$0xff]
          %v662 = vld [vmem:[#allocation9 + $0x1e0] sm:$0xff]
          %v663 = vld [vmem:[#allocation9 + $0x1e8] sm:$0xff]
          %v664 = vld [vmem:[#allocation9 + $0x1f0] sm:$0xff]
          %v665 = vld [vmem:[#allocation9 + $0x1f8] sm:$0xff]
          %666 = vmatprep.subr.mxu0 %v603
          %667 = vmatpush1.msra.mxu0 %v602
          %668 = vmatprep.subr.mxu0 %v607
          %669 = vmatpush1.msra.mxu0 %v606
          %670 = vmatprep.subr.mxu0 %v611
          %671 = vmatpush1.msra.mxu0 %v610
          %672 = vmatprep.subr.mxu0 %v615
          %673 = vmatpush1.msra.mxu0 %v614
          %674 = vmatprep.subr.mxu0 %v619
          %675 = vmatpush1.msra.mxu0 %v618
          %676 = vmatprep.subr.mxu0 %v623
          %677 = vmatpush1.msra.mxu0 %v622
          %678 = vmatprep.subr.mxu0 %v627
          %679 = vmatpush1.msra.mxu0 %v626
          %680 = vmatprep.subr.mxu0 %v631
          %681 = vmatpush1.msra.mxu0 %v630
          %682 = vmatprep.subr.mxu0 %v635
          %683 = vmatpush1.msra.mxu0 %v634
          %684 = vmatprep.subr.mxu0 %v639
          %685 = vmatpush1.msra.mxu0 %v638
          %686 = vmatprep.subr.mxu0 %v643
          %687 = vmatpush1.msra.mxu0 %v642
          %688 = vmatprep.subr.mxu0 %v647
          %689 = vmatpush1.msra.mxu0 %v646
          %690 = vmatprep.subr.mxu0 %v651
          %691 = vmatpush1.msra.mxu0 %v650
          %692 = vmatprep.subr.mxu0 %v655
          %693 = vmatpush1.msra.mxu0 %v654
          %694 = vmatprep.subr.mxu0 %v659
          %695 = vmatpush1.msra.mxu0 %v658
          %696 = vmatprep.subr.mxu0 %v663
          %697 = vmatpush1.msra.mxu0 %v662
          %698 = vmatprep.subr.mxu0 0.0
          %699 = vmatpush1.msra.mxu0 0.0
          %700 = vmatprep.subr.mxu0 0.0
          %701 = vmatpush1.msra.mxu0 0.0
          %702 = vmatprep.subr.mxu0 0.0
          %703 = vmatpush1.msra.mxu0 0.0
          %704 = vmatprep.subr.mxu0 0.0
          %705 = vmatpush1.msra.mxu0 0.0
          %706 = vmatprep.subr.mxu0 0.0
          %707 = vmatpush1.msra.mxu0 0.0
          %708 = vmatprep.subr.mxu0 0.0
          %709 = vmatpush1.msra.mxu0 0.0
          %710 = vmatprep.subr.mxu0 0.0
          %711 = vmatpush1.msra.mxu0 0.0
          %712 = vmatprep.subr.mxu0 0.0
          %713 = vmatpush1.msra.mxu0 0.0
          %714 = vmatprep.subr.mxu0 0.0
          %715 = vmatpush1.msra.mxu0 0.0
          %716 = vmatprep.subr.mxu0 0.0
          %717 = vmatpush1.msra.mxu0 0.0
          %718 = vmatprep.subr.mxu0 0.0
          %719 = vmatpush1.msra.mxu0 0.0
          %720 = vmatprep.subr.mxu0 0.0
          %721 = vmatpush1.msra.mxu0 0.0
          %722 = vmatprep.subr.mxu0 0.0
          %723 = vmatpush1.msra.mxu0 0.0
          %724 = vmatprep.subr.mxu0 0.0
          %725 = vmatpush1.msra.mxu0 0.0
          %726 = vmatprep.subr.mxu0 0.0
          %727 = vmatpush1.msra.mxu0 0.0
          %728 = vmatprep.subr.mxu0 0.0
          %729 = vmatpush1.msra.mxu0 0.0
          %730 = vmatprep.mubr.f32.mxu0 0.0
          %731 = vmatmul.mubr.f32.gmra.mrb[0].mxu0 %v590
          %v732 = vpop.f32.mrb[0].mxu0
          %v733 = vadd.f32 0.0, %v732
          %v734 = vpop.f32.mrb[0].mxu0
          %v735 = vadd.f32 0.0, %v734
          %736 = vdwg.mxu0
          %737 = vmatprep.subr.mxu0 %v605
          %738 = vmatpush1.msra.mxu0 %v604
          %739 = vmatprep.subr.mxu0 %v609
          %740 = vmatpush1.msra.mxu0 %v608
          %741 = vmatprep.subr.mxu0 %v613
          %742 = vmatpush1.msra.mxu0 %v612
          %743 = vmatprep.subr.mxu0 %v617
          %744 = vmatpush1.msra.mxu0 %v616
          %745 = vmatprep.subr.mxu0 %v621
          %746 = vmatpush1.msra.mxu0 %v620
          %747 = vmatprep.subr.mxu0 %v625
          %748 = vmatpush1.msra.mxu0 %v624
          %749 = vmatprep.subr.mxu0 %v629
          %750 = vmatpush1.msra.mxu0 %v628
          %751 = vmatprep.subr.mxu0 %v633
          %752 = vmatpush1.msra.mxu0 %v632
          %753 = vmatprep.subr.mxu0 %v637
          %754 = vmatpush1.msra.mxu0 %v636
          %755 = vmatprep.subr.mxu0 %v641
          %756 = vmatpush1.msra.mxu0 %v640
          %757 = vmatprep.subr.mxu0 %v645
          %758 = vmatpush1.msra.mxu0 %v644
          %759 = vmatprep.subr.mxu0 %v649
          %760 = vmatpush1.msra.mxu0 %v648
          %761 = vmatprep.subr.mxu0 %v653
          %762 = vmatpush1.msra.mxu0 %v652
          %763 = vmatprep.subr.mxu0 %v657
          %764 = vmatpush1.msra.mxu0 %v656
          %765 = vmatprep.subr.mxu0 %v661
          %766 = vmatpush1.msra.mxu0 %v660
          %767 = vmatprep.subr.mxu0 %v665
          %768 = vmatpush1.msra.mxu0 %v664
          %769 = vmatprep.subr.mxu0 0.0
          %770 = vmatpush1.msra.mxu0 0.0
          %771 = vmatprep.subr.mxu0 0.0
          %772 = vmatpush1.msra.mxu0 0.0
          %773 = vmatprep.subr.mxu0 0.0
          %774 = vmatpush1.msra.mxu0 0.0
          %775 = vmatprep.subr.mxu0 0.0
          %776 = vmatpush1.msra.mxu0 0.0
          %777 = vmatprep.subr.mxu0 0.0
          %778 = vmatpush1.msra.mxu0 0.0
          %779 = vmatprep.subr.mxu0 0.0
          %780 = vmatpush1.msra.mxu0 0.0
          %781 = vmatprep.subr.mxu0 0.0
          %782 = vmatpush1.msra.mxu0 0.0
          %783 = vmatprep.subr.mxu0 0.0
          %784 = vmatpush1.msra.mxu0 0.0
          %785 = vmatprep.subr.mxu0 0.0
          %786 = vmatpush1.msra.mxu0 0.0
          %787 = vmatprep.subr.mxu0 0.0
          %788 = vmatpush1.msra.mxu0 0.0
          %789 = vmatprep.subr.mxu0 0.0
          %790 = vmatpush1.msra.mxu0 0.0
          %791 = vmatprep.subr.mxu0 0.0
          %792 = vmatpush1.msra.mxu0 0.0
          %793 = vmatprep.subr.mxu0 0.0
          %794 = vmatpush1.msra.mxu0 0.0
          %795 = vmatprep.subr.mxu0 0.0
          %796 = vmatpush1.msra.mxu0 0.0
          %797 = vmatprep.subr.mxu0 0.0
          %798 = vmatpush1.msra.mxu0 0.0
          %799 = vmatprep.subr.mxu0 0.0
          %800 = vmatpush1.msra.mxu0 0.0
          %801 = vmatprep.mubr.f32.mxu0 0.0
          %802 = vmatmul.mubr.f32.gmra.mrb[0].mxu0 %v590
          %v803 = vpop.f32.mrb[0].mxu0
          %v804 = vadd.f32 0.0, %v803
          %v805 = vpop.f32.mrb[0].mxu0
          %v806 = vadd.f32 0.0, %v805
          %807 = vdwg.mxu0
          %v808 = vadd.f32 %v598, %v733
          %v809 = vadd.f32 %v599, %v735
          %v810 = vadd.f32 %v600, %v804
          %v811 = vadd.f32 %v601, %v806
          %v812 = vxor.u32 %v808, 2147483648
          %v813 = vmul.f32 %v812, 1.442695
          %v814 = vpow.pop %v813
          %v815 = vadd.f32 %v814, 1.0
          %v816 = vrcp.pop %v815
          %v817 = vmul.f32 1.0, %v816
          %v818 = vxor.u32 %v809, 2147483648
          %v819 = vmul.f32 %v818, 1.442695
          %v820 = vpow.pop %v819
          %v821 = vadd.f32 %v820, 1.0
          %v822 = vrcp.pop %v821
          %v823 = vmul.f32 1.0, %v822
          %v824 = vtanh.pop %v810
          %v825 = vxor.u32 %v811, 2147483648
          %v826 = vmul.f32 %v825, 1.442695
          %v827 = vpow.pop %v826
          %v828 = vadd.f32 %v827, 1.0
          %v829 = vrcp.pop %v828
          %v830 = vmul.f32 1.0, %v829
          %v831 = vmul.f32 %v823, %v591
          %v832 = vmul.f32 %v817, %v824
          %v833 = vadd.f32 %v831, %v832
          %v834 = vtanh.pop %v833
          %v835 = vmul.f32 %v830, %v834
          %s836 = scalar_lea.vmem [#allocation3], %s592
          %837 = vst [vmem:[%s836] sm:$0xff] %v835
          %s838 = sadd.s32 %s592, 8
          %s839 = sshra.s32 %s838, 3
          %s840 = sand.u32 %s838, 7
          %s841 = smul.u32 %s839, 4
          %s842 = smul.addr %s841, 8
          %s843 = scalar_lea.vmem [#allocation2], %s842
          %v844 = vld [vmem:[%s843] sm:$0xff]
          %v845 = vld [vmem:[%s843 + $0x8] sm:$0xff]
          %v846 = vld [vmem:[%s843 + $0x10] sm:$0xff]
          %v847 = vld [vmem:[%s843 + $0x18] sm:$0xff]
          %v848 = vld [vmem:[#allocation9] sm:$0xff]
          %v849 = vld [vmem:[#allocation9 + $0x8] sm:$0xff]
          %v850 = vld [vmem:[#allocation9 + $0x10] sm:$0xff]
          %v851 = vld [vmem:[#allocation9 + $0x18] sm:$0xff]
          %v852 = vld [vmem:[#allocation9 + $0x20] sm:$0xff]
          %v853 = vld [vmem:[#allocation9 + $0x28] sm:$0xff]
          %v854 = vld [vmem:[#allocation9 + $0x30] sm:$0xff]
          %v855 = vld [vmem:[#allocation9 + $0x38] sm:$0xff]
          %v856 = vld [vmem:[#allocation9 + $0x40] sm:$0xff]
          %v857 = vld [vmem:[#allocation9 + $0x48] sm:$0xff]
          %v858 = vld [vmem:[#allocation9 + $0x50] sm:$0xff]
          %v859 = vld [vmem:[#allocation9 + $0x58] sm:$0xff]
          %v860 = vld [vmem:[#allocation9 + $0x60] sm:$0xff]
          %v861 = vld [vmem:[#allocation9 + $0x68] sm:$0xff]
          %v862 = vld [vmem:[#allocation9 + $0x70] sm:$0xff]
          %v863 = vld [vmem:[#allocation9 + $0x78] sm:$0xff]
          %v864 = vld [vmem:[#allocation9 + $0x80] sm:$0xff]
          %v865 = vld [vmem:[#allocation9 + $0x88] sm:$0xff]
          %v866 = vld [vmem:[#allocation9 + $0x90] sm:$0xff]
          %v867 = vld [vmem:[#allocation9 + $0x98] sm:$0xff]
          %v868 = vld [vmem:[#allocation9 + $0xa0] sm:$0xff]
          %v869 = vld [vmem:[#allocation9 + $0xa8] sm:$0xff]
          %v870 = vld [vmem:[#allocation9 + $0xb0] sm:$0xff]
          %v871 = vld [vmem:[#allocation9 + $0xb8] sm:$0xff]
          %v872 = vld [vmem:[#allocation9 + $0xc0] sm:$0xff]
          %v873 = vld [vmem:[#allocation9 + $0xc8] sm:$0xff]
          %v874 = vld [vmem:[#allocation9 + $0xd0] sm:$0xff]
          %v875 = vld [vmem:[#allocation9 + $0xd8] sm:$0xff]
          %v876 = vld [vmem:[#allocation9 + $0xe0] sm:$0xff]
          %v877 = vld [vmem:[#allocation9 + $0xe8] sm:$0xff]
          %v878 = vld [vmem:[#allocation9 + $0xf0] sm:$0xff]
          %v879 = vld [vmem:[#allocation9 + $0xf8] sm:$0xff]
          %v880 = vld [vmem:[#allocation9 + $0x100] sm:$0xff]
          %v881 = vld [vmem:[#allocation9 + $0x108] sm:$0xff]
          %v882 = vld [vmem:[#allocation9 + $0x110] sm:$0xff]
          %v883 = vld [vmem:[#allocation9 + $0x118] sm:$0xff]
          %v884 = vld [vmem:[#allocation9 + $0x120] sm:$0xff]
          %v885 = vld [vmem:[#allocation9 + $0x128] sm:$0xff]
          %v886 = vld [vmem:[#allocation9 + $0x130] sm:$0xff]
          %v887 = vld [vmem:[#allocation9 + $0x138] sm:$0xff]
          %v888 = vld [vmem:[#allocation9 + $0x140] sm:$0xff]
          %v889 = vld [vmem:[#allocation9 + $0x148] sm:$0xff]
          %v890 = vld [vmem:[#allocation9 + $0x150] sm:$0xff]
          %v891 = vld [vmem:[#allocation9 + $0x158] sm:$0xff]
          %v892 = vld [vmem:[#allocation9 + $0x160] sm:$0xff]
          %v893 = vld [vmem:[#allocation9 + $0x168] sm:$0xff]
          %v894 = vld [vmem:[#allocation9 + $0x170] sm:$0xff]
          %v895 = vld [vmem:[#allocation9 + $0x178] sm:$0xff]
          %v896 = vld [vmem:[#allocation9 + $0x180] sm:$0xff]
          %v897 = vld [vmem:[#allocation9 + $0x188] sm:$0xff]
          %v898 = vld [vmem:[#allocation9 + $0x190] sm:$0xff]
          %v899 = vld [vmem:[#allocation9 + $0x198] sm:$0xff]
          %v900 = vld [vmem:[#allocation9 + $0x1a0] sm:$0xff]
          %v901 = vld [vmem:[#allocation9 + $0x1a8] sm:$0xff]
          %v902 = vld [vmem:[#allocation9 + $0x1b0] sm:$0xff]
          %v903 = vld [vmem:[#allocation9 + $0x1b8] sm:$0xff]
          %v904 = vld [vmem:[#allocation9 + $0x1c0] sm:$0xff]
          %v905 = vld [vmem:[#allocation9 + $0x1c8] sm:$0xff]
          %v906 = vld [vmem:[#allocation9 + $0x1d0] sm:$0xff]
          %v907 = vld [vmem:[#allocation9 + $0x1d8] sm:$0xff]
          %v908 = vld [vmem:[#allocation9 + $0x1e0] sm:$0xff]
          %v909 = vld [vmem:[#allocation9 + $0x1e8] sm:$0xff]
          %v910 = vld [vmem:[#allocation9 + $0x1f0] sm:$0xff]
          %v911 = vld [vmem:[#allocation9 + $0x1f8] sm:$0xff]
          %912 = vmatprep.subr.mxu0 %v849
          %913 = vmatpush1.msra.mxu0 %v848
          %914 = vmatprep.subr.mxu0 %v853
          %915 = vmatpush1.msra.mxu0 %v852
          %916 = vmatprep.subr.mxu0 %v857
          %917 = vmatpush1.msra.mxu0 %v856
          %918 = vmatprep.subr.mxu0 %v861
          %919 = vmatpush1.msra.mxu0 %v860
          %920 = vmatprep.subr.mxu0 %v865
          %921 = vmatpush1.msra.mxu0 %v864
          %922 = vmatprep.subr.mxu0 %v869
          %923 = vmatpush1.msra.mxu0 %v868
          %924 = vmatprep.subr.mxu0 %v873
          %925 = vmatpush1.msra.mxu0 %v872
          %926 = vmatprep.subr.mxu0 %v877
          %927 = vmatpush1.msra.mxu0 %v876
          %928 = vmatprep.subr.mxu0 %v881
          %929 = vmatpush1.msra.mxu0 %v880
          %930 = vmatprep.subr.mxu0 %v885
          %931 = vmatpush1.msra.mxu0 %v884
          %932 = vmatprep.subr.mxu0 %v889
          %933 = vmatpush1.msra.mxu0 %v888
          %934 = vmatprep.subr.mxu0 %v893
          %935 = vmatpush1.msra.mxu0 %v892
          %936 = vmatprep.subr.mxu0 %v897
          %937 = vmatpush1.msra.mxu0 %v896
          %938 = vmatprep.subr.mxu0 %v901
          %939 = vmatpush1.msra.mxu0 %v900
          %940 = vmatprep.subr.mxu0 %v905
          %941 = vmatpush1.msra.mxu0 %v904
          %942 = vmatprep.subr.mxu0 %v909
          %943 = vmatpush1.msra.mxu0 %v908
          %944 = vmatprep.subr.mxu0 0.0
          %945 = vmatpush1.msra.mxu0 0.0
          %946 = vmatprep.subr.mxu0 0.0
          %947 = vmatpush1.msra.mxu0 0.0
          %948 = vmatprep.subr.mxu0 0.0
          %949 = vmatpush1.msra.mxu0 0.0
          %950 = vmatprep.subr.mxu0 0.0
          %951 = vmatpush1.msra.mxu0 0.0
          %952 = vmatprep.subr.mxu0 0.0
          %953 = vmatpush1.msra.mxu0 0.0
          %954 = vmatprep.subr.mxu0 0.0
          %955 = vmatpush1.msra.mxu0 0.0
          %956 = vmatprep.subr.mxu0 0.0
          %957 = vmatpush1.msra.mxu0 0.0
          %958 = vmatprep.subr.mxu0 0.0
          %959 = vmatpush1.msra.mxu0 0.0
          %960 = vmatprep.subr.mxu0 0.0
          %961 = vmatpush1.msra.mxu0 0.0
          %962 = vmatprep.subr.mxu0 0.0
          %963 = vmatpush1.msra.mxu0 0.0
          %964 = vmatprep.subr.mxu0 0.0
          %965 = vmatpush1.msra.mxu0 0.0
          %966 = vmatprep.subr.mxu0 0.0
          %967 = vmatpush1.msra.mxu0 0.0
          %968 = vmatprep.subr.mxu0 0.0
          %969 = vmatpush1.msra.mxu0 0.0
          %970 = vmatprep.subr.mxu0 0.0
          %971 = vmatpush1.msra.mxu0 0.0
          %972 = vmatprep.subr.mxu0 0.0
          %973 = vmatpush1.msra.mxu0 0.0
          %974 = vmatprep.subr.mxu0 0.0
          %975 = vmatpush1.msra.mxu0 0.0
          %976 = vmatprep.mubr.f32.mxu0 0.0
          %977 = vmatmul.mubr.f32.gmra.mrb[0].mxu0 %v835
          %v978 = vpop.f32.mrb[0].mxu0
          %v979 = vadd.f32 0.0, %v978
          %v980 = vpop.f32.mrb[0].mxu0
          %v981 = vadd.f32 0.0, %v980
          %982 = vdwg.mxu0
          %983 = vmatprep.subr.mxu0 %v851
          %984 = vmatpush1.msra.mxu0 %v850
          %985 = vmatprep.subr.mxu0 %v855
          %986 = vmatpush1.msra.mxu0 %v854
          %987 = vmatprep.subr.mxu0 %v859
          %988 = vmatpush1.msra.mxu0 %v858
          %989 = vmatprep.subr.mxu0 %v863
          %990 = vmatpush1.msra.mxu0 %v862
          %991 = vmatprep.subr.mxu0 %v867
          %992 = vmatpush1.msra.mxu0 %v866
          %993 = vmatprep.subr.mxu0 %v871
          %994 = vmatpush1.msra.mxu0 %v870
          %995 = vmatprep.subr.mxu0 %v875
          %996 = vmatpush1.msra.mxu0 %v874
          %997 = vmatprep.subr.mxu0 %v879
          %998 = vmatpush1.msra.mxu0 %v878
          %999 = vmatprep.subr.mxu0 %v883
          %1000 = vmatpush1.msra.mxu0 %v882
          %1001 = vmatprep.subr.mxu0 %v887
          %1002 = vmatpush1.msra.mxu0 %v886
          %1003 = vmatprep.subr.mxu0 %v891
          %1004 = vmatpush1.msra.mxu0 %v890
          %1005 = vmatprep.subr.mxu0 %v895
          %1006 = vmatpush1.msra.mxu0 %v894
          %1007 = vmatprep.subr.mxu0 %v899
          %1008 = vmatpush1.msra.mxu0 %v898
          %1009 = vmatprep.subr.mxu0 %v903
          %1010 = vmatpush1.msra.mxu0 %v902
          %1011 = vmatprep.subr.mxu0 %v907
          %1012 = vmatpush1.msra.mxu0 %v906
          %1013 = vmatprep.subr.mxu0 %v911
          %1014 = vmatpush1.msra.mxu0 %v910
          %1015 = vmatprep.subr.mxu0 0.0
          %1016 = vmatpush1.msra.mxu0 0.0
          %1017 = vmatprep.subr.mxu0 0.0
          %1018 = vmatpush1.msra.mxu0 0.0
          %1019 = vmatprep.subr.mxu0 0.0
          %1020 = vmatpush1.msra.mxu0 0.0
          %1021 = vmatprep.subr.mxu0 0.0
          %1022 = vmatpush1.msra.mxu0 0.0
          %1023 = vmatprep.subr.mxu0 0.0
          %1024 = vmatpush1.msra.mxu0 0.0
          %1025 = vmatprep.subr.mxu0 0.0
          %1026 = vmatpush1.msra.mxu0 0.0
          %1027 = vmatprep.subr.mxu0 0.0
          %1028 = vmatpush1.msra.mxu0 0.0
          %1029 = vmatprep.subr.mxu0 0.0
          %1030 = vmatpush1.msra.mxu0 0.0
          %1031 = vmatprep.subr.mxu0 0.0
          %1032 = vmatpush1.msra.mxu0 0.0
          %1033 = vmatprep.subr.mxu0 0.0
          %1034 = vmatpush1.msra.mxu0 0.0
          %1035 = vmatprep.subr.mxu0 0.0
          %1036 = vmatpush1.msra.mxu0 0.0
          %1037 = vmatprep.subr.mxu0 0.0
          %1038 = vmatpush1.msra.mxu0 0.0
          %1039 = vmatprep.subr.mxu0 0.0
          %1040 = vmatpush1.msra.mxu0 0.0
          %1041 = vmatprep.subr.mxu0 0.0
          %1042 = vmatpush1.msra.mxu0 0.0
          %1043 = vmatprep.subr.mxu0 0.0
          %1044 = vmatpush1.msra.mxu0 0.0
          %1045 = vmatprep.subr.mxu0 0.0
          %1046 = vmatpush1.msra.mxu0 0.0
          %1047 = vmatprep.mubr.f32.mxu0 0.0
          %1048 = vmatmul.mubr.f32.gmra.mrb[0].mxu0 %v835
          %v1049 = vpop.f32.mrb[0].mxu0
          %v1050 = vadd.f32 0.0, %v1049
          %v1051 = vpop.f32.mrb[0].mxu0
          %v1052 = vadd.f32 0.0, %v1051
          %1053 = vdwg.mxu0
          %v1054 = vadd.f32 %v844, %v979
          %v1055 = vadd.f32 %v845, %v981
          %v1056 = vadd.f32 %v846, %v1050
          %v1057 = vadd.f32 %v847, %v1052
          %v1058 = vxor.u32 %v1054, 2147483648
          %v1059 = vmul.f32 %v1058, 1.442695
          %v1060 = vpow.pop %v1059
          %v1061 = vadd.f32 %v1060, 1.0
          %v1062 = vrcp.pop %v1061
          %v1063 = vmul.f32 1.0, %v1062
          %v1064 = vxor.u32 %v1055, 2147483648
          %v1065 = vmul.f32 %v1064, 1.442695
          %v1066 = vpow.pop %v1065
          %v1067 = vadd.f32 %v1066, 1.0
          %v1068 = vrcp.pop %v1067
          %v1069 = vmul.f32 1.0, %v1068
          %v1070 = vtanh.pop %v1056
          %v1071 = vxor.u32 %v1057, 2147483648
          %v1072 = vmul.f32 %v1071, 1.442695
          %v1073 = vpow.pop %v1072
          %v1074 = vadd.f32 %v1073, 1.0
          %v1075 = vrcp.pop %v1074
          %v1076 = vmul.f32 1.0, %v1075
          %v1077 = vmul.f32 %v1069, %v833
          %v1078 = vmul.f32 %v1063, %v1070
          %v1079 = vadd.f32 %v1077, %v1078
          %v1080 = vtanh.pop %v1079
          %v1081 = vmul.f32 %v1076, %v1080
          %s1082 = scalar_lea.vmem [#allocation3], %s838
          %1083 = vst [vmem:[%s1082] sm:$0xff] %v1081
          %1084 = vst [vmem:[#allocation4] sm:$0xff] %v1081
          %1085 = vst [vmem:[#allocation5] sm:$0xff] %v1079
        $region65: #{tpu_custom_call.1} parent=43 // loop_footer
          %s589 = sadd.s32 1, %s585
        $region66: #{tpu_custom_call.1} parent=43 // loop_footer_branch
          %584 = sbr.rel target = $region62
        $region67: #{tpu_custom_call.1} parent=43 // loop_exit
          _
        %v1086 = vld [vmem:[#allocation3] sm:$0xff]
        %v1087 = vld [vmem:[#allocation3 + $0x8] sm:$0xff]
        %v1088 = vld [vmem:[#allocation3 + $0x10] sm:$0xff]
        %v1089 = vld [vmem:[#allocation3 + $0x18] sm:$0xff]
        %v1090 = vld [vmem:[#allocation11] sm:$0xff]
        %v1091 = vld [vmem:[#allocation11 + $0x8] sm:$0xff]
        %v1092 = vld [vmem:[#allocation11 + $0x10] sm:$0xff]
        %v1093 = vld [vmem:[#allocation11 + $0x18] sm:$0xff]
        %v1094 = vld [vmem:[#allocation11 + $0x20] sm:$0xff]
        %v1095 = vld [vmem:[#allocation11 + $0x28] sm:$0xff]
        %v1096 = vld [vmem:[#allocation11 + $0x30] sm:$0xff]
        %v1097 = vld [vmem:[#allocation11 + $0x38] sm:$0xff]
        %v1098 = vld [vmem:[#allocation11 + $0x40] sm:$0xff]
        %v1099 = vld [vmem:[#allocation11 + $0x48] sm:$0xff]
        %v1100 = vld [vmem:[#allocation11 + $0x50] sm:$0xff]
        %v1101 = vld [vmem:[#allocation11 + $0x58] sm:$0xff]
        %v1102 = vld [vmem:[#allocation11 + $0x60] sm:$0xff]
        %v1103 = vld [vmem:[#allocation11 + $0x68] sm:$0xff]
        %v1104 = vld [vmem:[#allocation11 + $0x70] sm:$0xff]
        %v1105 = vld [vmem:[#allocation11 + $0x78] sm:$0xff]
        %v1106 = vld [vmem:[%s5] sm:$0x1]
        %v1108 = vlaneseq
        %v1109 = vshrl.u32 %v1108, 7
        %v1110 = vsub.s32 0, %v1109
        %v1111 = vrot.slane %v1106, %v1110
        %1113 = vmatprep.subr.mxu0 0.0
        %1114 = vmatpush1.msra.mxu0 %v1090
        %1115 = vmatprep.subr.mxu0 0.0
        %1116 = vmatpush1.msra.mxu0 %v1091
        %1117 = vmatprep.subr.mxu0 0.0
        %1118 = vmatpush1.msra.mxu0 %v1092
        %1119 = vmatprep.subr.mxu0 0.0
        %1120 = vmatpush1.msra.mxu0 %v1093
        %1121 = vmatprep.subr.mxu0 0.0
        %1122 = vmatpush1.msra.mxu0 %v1094
        %1123 = vmatprep.subr.mxu0 0.0
        %1124 = vmatpush1.msra.mxu0 %v1095
        %1125 = vmatprep.subr.mxu0 0.0
        %1126 = vmatpush1.msra.mxu0 %v1096
        %1127 = vmatprep.subr.mxu0 0.0
        %1128 = vmatpush1.msra.mxu0 %v1097
        %1129 = vmatprep.subr.mxu0 0.0
        %1130 = vmatpush1.msra.mxu0 %v1098
        %1131 = vmatprep.subr.mxu0 0.0
        %1132 = vmatpush1.msra.mxu0 %v1099
        %1133 = vmatprep.subr.mxu0 0.0
        %1134 = vmatpush1.msra.mxu0 %v1100
        %1135 = vmatprep.subr.mxu0 0.0
        %1136 = vmatpush1.msra.mxu0 %v1101
        %1137 = vmatprep.subr.mxu0 0.0
        %1138 = vmatpush1.msra.mxu0 %v1102
        %1139 = vmatprep.subr.mxu0 0.0
        %1140 = vmatpush1.msra.mxu0 %v1103
        %1141 = vmatprep.subr.mxu0 0.0
        %1142 = vmatpush1.msra.mxu0 %v1104
        %1143 = vmatprep.subr.mxu0 0.0
        %1144 = vmatpush1.msra.mxu0 %v1105
        %1145 = vmatprep.subr.mxu0 0.0
        %1146 = vmatpush1.msra.mxu0 0.0
        %1147 = vmatprep.subr.mxu0 0.0
        %1148 = vmatpush1.msra.mxu0 0.0
        %1149 = vmatprep.subr.mxu0 0.0
        %1150 = vmatpush1.msra.mxu0 0.0
        %1151 = vmatprep.subr.mxu0 0.0
        %1152 = vmatpush1.msra.mxu0 0.0
        %1153 = vmatprep.subr.mxu0 0.0
        %1154 = vmatpush1.msra.mxu0 0.0
        %1155 = vmatprep.subr.mxu0 0.0
        %1156 = vmatpush1.msra.mxu0 0.0
        %1157 = vmatprep.subr.mxu0 0.0
        %1158 = vmatpush1.msra.mxu0 0.0
        %1159 = vmatprep.subr.mxu0 0.0
        %1160 = vmatpush1.msra.mxu0 0.0
        %1161 = vmatprep.subr.mxu0 0.0
        %1162 = vmatpush1.msra.mxu0 0.0
        %1163 = vmatprep.subr.mxu0 0.0
        %1164 = vmatpush1.msra.mxu0 0.0
        %1165 = vmatprep.subr.mxu0 0.0
        %1166 = vmatpush1.msra.mxu0 0.0
        %1167 = vmatprep.subr.mxu0 0.0
        %1168 = vmatpush1.msra.mxu0 0.0
        %1169 = vmatprep.subr.mxu0 0.0
        %1170 = vmatpush1.msra.mxu0 0.0
        %1171 = vmatprep.subr.mxu0 0.0
        %1172 = vmatpush1.msra.mxu0 0.0
        %1173 = vmatprep.subr.mxu0 0.0
        %1174 = vmatpush1.msra.mxu0 0.0
        %1175 = vmatprep.subr.mxu0 0.0
        %1176 = vmatpush1.msra.mxu0 0.0
        %1177 = vmatprep.mubr.f32.mxu0 0.0
        %1178 = vmatmul.mubr.f32.gmra.mrb[0].mxu0 %v1086
        %v1179 = vpop.f32.mrb[0].mxu0
        %v1180 = vadd.f32 %v1111, %v1179
        %v1181 = vpop.f32.mrb[0].mxu0
        %1182 = vmatprep.mubr.f32.mxu0 0.0
        %1183 = vmatmul.mubr.f32.gmra.mrb[0].mxu0 %v1087
        %v1184 = vpop.f32.mrb[0].mxu0
        %v1185 = vadd.f32 %v1111, %v1184
        %v1186 = vpop.f32.mrb[0].mxu0
        %1187 = vmatprep.mubr.f32.mxu0 0.0
        %1188 = vmatmul.mubr.f32.gmra.mrb[0].mxu0 %v1088
        %v1189 = vpop.f32.mrb[0].mxu0
        %v1190 = vadd.f32 %v1111, %v1189
        %v1191 = vpop.f32.mrb[0].mxu0
        %1192 = vmatprep.mubr.f32.mxu0 0.0
        %1193 = vmatmul.mubr.f32.gmra.mrb[0].mxu0 %v1089
        %v1194 = vpop.f32.mrb[0].mxu0
        %v1195 = vadd.f32 %v1111, %v1194
        %v1196 = vpop.f32.mrb[0].mxu0
        %1197 = vdwg.mxu0
        %1198 = vst [vmem:[%s315] sm:$0xff] %v1180
        %1199 = vst [vmem:[%s315 + $0x8] sm:$0xff] %v1185
        %1200 = vst [vmem:[%s315 + $0x10] sm:$0xff] %v1190
        %1201 = vst [vmem:[%s315 + $0x18] sm:$0xff] %v1195
        %s1202 = sand.u32 %s181, 1
        %s1203 = scalar_lea.sflag [#allocation8], %s1202
        %s1204 = sand.u32 %s181, 1
        %s1205 = smul.addr %s1204, 32
        %s1206 = scalar_lea.vmem [#allocation12], %s1205
        // Predicated region
        $region68: #{tpu_custom_call.1} parent=43 // pred_check
          %p1207 = pneg %p191
        $region69: #{tpu_custom_call.1} parent=43 // pred_check_branch
          %1209 = sbr.rel (%p1207) target = $region71
        $region70: #{tpu_custom_call.1} parent=43 // pred_region
          %s1210 = smul.u32 %s26, 2
          %s1211 = sadd.s32 %s1210, %s27
          %s1212 = smul.u32 4, %s1211
          %s1214 = ssub.s32 512, 512
          %1215 = vsyncadd %s1203, %s1214
          %s1216 = smul.addr %s1212, 128
          %s1217 = scalar_lea.hbm %s6, %s1216
          %s1218 = sshll.u32 %s1206, 4
          %s1219 = int_to_ptr.vmem [resolvable:$true] %s1218
          %1224 = dma.vmem_to_hbm [thread:$0]  %s1219, 512, %s1217, %s1203, 128, 128, 8
        $region71: #{tpu_custom_call.1} parent=43 // pred_fallthru
          _
      $region44: #{tpu_custom_call.1} parent=5 // pred_fallthru
        _
      %p1225 = scmp.le.s32.totalorder 2, %s17
      // Predicated region
      $region72: #{tpu_custom_call.1} parent=5 // pred_check
        %p1226 = pneg %p1225
      $region73: #{tpu_custom_call.1} parent=5 // pred_check_branch
        %1228 = sbr.rel (%p1226) target = $region75
      $region74: #{tpu_custom_call.1} parent=5 // pred_region
        %s1229 = ssub.s32 %s17, 2
        // Predicated region
        $region76: #{tpu_custom_call.1} parent=74 // pred_check
          %p1230 = pneg %p197
        $region77: #{tpu_custom_call.1} parent=74 // pred_check_branch
          %1232 = sbr.rel (%p1230) target = $region79
        $region78: #{tpu_custom_call.1} parent=74 // pred_region
          %s1233 = sand.u32 %s182, 1
          %s1234 = scalar_lea.sflag [#allocation8], %s1233
          %s1235 = sand.u32 %s182, 1
          %s1236 = smul.addr %s1235, 32
          %s1237 = scalar_lea.vmem [#allocation12], %s1236
          %1238 = dma.done %s1234, 512
        $region79: #{tpu_custom_call.1} parent=74 // pred_fallthru
          _
      $region75: #{tpu_custom_call.1} parent=5 // pred_fallthru
        _
    $region6: #{tpu_custom_call.1} parent=1 // loop_footer
      %s21 = sadd.s32 1, %s17
    $region7: #{tpu_custom_call.1} parent=1 // loop_footer_branch
      %16 = sbr.rel target = $region3
    $region8: #{tpu_custom_call.1} parent=1 // loop_exit
      _
    %1239 = vsyncpa [#allocation7], 1
    %s1240 = scalar_lea.sflag [#allocation7], 1
    %1241 = vsyncpa %s1240, 1
    %1242 = vsyncpa [#allocation10], 1
    %1243 = vsyncpa [#allocation8], 1
    %s1244 = scalar_lea.sflag [#allocation8], 1
    %1245 = vsyncpa %s1244, 1

</llo_original>
